<compile_context>
chip_gen: v7x
topology: tpu7x:2x2x1
jax: 0.10.0
libtpu: 0.0.40
codegen_flags: <defaults>
</compile_context>

<pallas_src>
import functools

import jax
import jax.numpy as jnp
from jax.experimental import pallas as pl
from jax.experimental.pallas import tpu as pltpu


_DILATIONS = (1, 2, 3, 4)   # dilations used by MergeRun (conv1/conv2 per branch)
_MAX_PAD = 4                # zero-halo width baked into the flattened layout
assert _MAX_PAD >= max(_DILATIONS), "halo must cover the largest dilation"


def _flat_geometry(H, W):
    """Static geometry of the flattened, zero-padded, channels-first layout."""
    P = _MAX_PAD
    HP, WP = H + 2 * P, W + 2 * P
    lspan = H * WP                       # flat span covering every output pixel
    base0 = P * WP + P                   # flat offset of image pixel (0, 0)
    lead = (-base0) % 128                # leading zeros -> interior lane-aligned
    base = lead + base0                  # aligned interior start (mult. of 128)
    max_off = (WP + 1) * P               # largest |tap offset| (== base0)
    F = base + max_off + lspan
    F = ((F + 127) // 128) * 128         # per-image buffer length (lane multiple)
    return P, HP, WP, lspan, lead, base, F


def _make_merge_run_kernel(H, W, C, imgs, matmul_dtype):
    P, HP, WP, LSPAN, LEAD, BASE, F = _flat_geometry(H, W)
    LO, HI = BASE, BASE + LSPAN          # both multiples of 128 per image
    WIDE = imgs * LSPAN
    TAP_OFFS = tuple((ky - 1) * WP + (kx - 1) for ky in range(3) for kx in range(3))

    def kernel(x_ref, mask_ref, wa_ref, ba_ref, wb_ref, bb_ref, wc_ref, bc_ref,
               out_ref, bufb, patch):
        # bufb rows [0:C] hold branch 1, rows [C:2C] hold branch 2.
        # Zero ONLY the halo columns; the interior [LO, HI) of every image is
        # fully overwritten each stage (v5e: don't waste the single vst slot).
        for i in range(imgs):
            bufb[:, i * F:i * F + LO] = jnp.zeros((2 * C, LO), jnp.float32)
            bufb[:, i * F + HI:(i + 1) * F] = jnp.zeros((2 * C, F - HI), jnp.float32)

        # Pad-column mask, broadcast hoisted once (JAX does not CSE broadcasts).
        maskb = jnp.broadcast_to(mask_ref[...], (2 * C, WIDE))

        def stage_half(half, src_ref, rows, dil):
            """Stage the 9 dilated tap-slices of `src_ref[rows]` into patch rows
            [half*9*C, (half+1)*9*C). One lane-dense slab store per (tap, image)."""
            for t, base_off in enumerate(TAP_OFFS):
                off = base_off * dil
                r0 = (half * 9 + t) * C
                for i in range(imgs):
                    patch[r0:r0 + C, i * LSPAN:(i + 1) * LSPAN] = (
                        src_ref[rows, i * F + LO + off:i * F + HI + off]
                        .astype(matmul_dtype))
            # TODO(synk): once imgs > 1 / W >= 64, replace the lane-misaligned
            # source slices with one pltpu.roll per tap + lane-aligned slices.

        def stage_full(src_ref, dil):
            """Stage all 2C channels per tap (both branches share the dilation)."""
            for t, base_off in enumerate(TAP_OFFS):
                off = base_off * dil
                for i in range(imgs):
                    patch[t * 2 * C:(t + 1) * 2 * C, i * LSPAN:(i + 1) * LSPAN] = (
                        src_ref[:, i * F + LO + off:i * F + HI + off]
                        .astype(matmul_dtype))

        def scatter(y):
            """Write masked stage output (2C, WIDE) back into the image interiors."""
            for i in range(imgs):
                bufb[:, i * F + LO:i * F + HI] = y[:, i * LSPAN:(i + 1) * LSPAN]

        # ---- stage A: branch1 conv1 (dil 1) + branch2 conv1 (dil 3) fused into
        #      one (2C, 18C) @ (18C, WIDE) matmul (block-diagonal weights).
        stage_half(0, x_ref, slice(0, C), 1)
        stage_half(1, x_ref, slice(0, C), 3)
        y = jnp.dot(wa_ref[...], patch[...], preferred_element_type=jnp.float32)
        scatter(jnp.maximum(y + ba_ref[...], 0.0) * maskb)

        # ---- stage B: branch1 conv2 (dil 2) + branch2 conv2 (dil 4), fused.
        stage_half(0, bufb, slice(0, C), 2)
        stage_half(1, bufb, slice(C, 2 * C), 4)
        y = jnp.dot(wb_ref[...], patch[...], preferred_element_type=jnp.float32)
        scatter(jnp.maximum(y + bb_ref[...], 0.0) * maskb)

        # ---- stage C: aggregation conv over concat([b1, b2]) (the concat is the
        #      channel layout of bufb / the packed weight columns), ReLU, residual.
        stage_full(bufb, 1)
        y = jnp.dot(wc_ref[...], patch[...], preferred_element_type=jnp.float32)
        y = jnp.maximum(y + bc_ref[...], 0.0)
        for i in range(imgs):
            out_ref[:, i * LSPAN:(i + 1) * LSPAN] = (
                y[:, i * LSPAN:(i + 1) * LSPAN]
                + x_ref[:, i * F + LO:i * F + HI]).astype(out_ref.dtype)

        # TODO(synk): at real RIDNet widths (C=64) add an inner lane-chunk loop
        # over WIDE (128/256-lane chunks) to bound vreg pressure of the staged
        # patch / accumulator before the fused matmuls.

    return kernel


# ------------------------------ host-side helpers ------------------------------

def _pack_taps(w):
    """(9, Cout, Cin) tap-major conv weight -> lane-dense (Cout, 9*Cin)."""
    cout, cin = w.shape[1], w.shape[2]
    return jnp.transpose(w, (1, 0, 2)).reshape(cout, 9 * cin)


def _block_diag(w_top, w_bot):
    """[[w_top, 0], [0, w_bot]]: fuses two same-stage convs into one matmul."""
    zt = jnp.zeros((w_top.shape[0], w_bot.shape[1]), w_top.dtype)
    zb = jnp.zeros((w_bot.shape[0], w_top.shape[1]), w_bot.dtype)
    return jnp.concatenate(
        [jnp.concatenate([w_top, zt], axis=1),
         jnp.concatenate([zb, w_bot], axis=1)], axis=0)


def _auto_imgs_per_step(N):
    """Largest divisor of N that keeps >= 2 grid steps (v7x has 2 TensorCores).
    For N == 1 there is only one grid step; splitting the lane span over a
    second 'parallel' axis would be the next step for v7x occupancy."""
    for d in range(N // 2, 0, -1):
        if N % d == 0:
            return d
    return 1


def init_merge_run_params(key, in_channels, out_channels):
    """Synthetic parameters. Conv weights are (9, Cout, Cin) with tap = ky*3+kx;
    biases are (Cout, 1)."""
    ks = jax.random.split(key, 10)

    def w(k, cout, cin):
        return jax.random.normal(k, (9, cout, cin), jnp.float32) * 0.1

    def bias(k, cout):
        return jax.random.normal(k, (cout, 1), jnp.float32) * 0.05

    ci, co = in_channels, out_channels
    return dict(
        d1_w1=w(ks[0], co, ci),  d1_b1=bias(ks[1], co),
        d1_w2=w(ks[2], co, co),  d1_b2=bias(ks[3], co),
        d2_w1=w(ks[4], co, ci),  d2_b1=bias(ks[5], co),
        d2_w2=w(ks[6], co, co),  d2_b2=bias(ks[7], co),
        agg_w=w(ks[8], co, 2 * co), agg_b=bias(ks[9], co),
    )


@functools.partial(jax.jit, static_argnames=("imgs_per_step", "matmul_dtype"))
def merge_run_nchw(x, p, *, imgs_per_step=None, matmul_dtype=jnp.float32):
    """PyTorch-compatible entry point: NCHW in, NCHW out, one fused kernel.

    matmul_dtype=jnp.bfloat16 is the recommended MXU-operand setting for real
    RIDNet widths (C=64) on v6e/v7x; elementwise math and accumulation stay f32.
    """
    N, C, H, W = x.shape
    c_out = p["d1_b1"].shape[0]
    assert c_out == C, "residual add requires out_channels == in_channels"
    P, HP, WP, LSPAN, LEAD, BASE, F = _flat_geometry(H, W)

    imgs = imgs_per_step if imgs_per_step is not None else _auto_imgs_per_step(N)
    assert N % imgs == 0, "batch must be divisible by imgs_per_step"
    G = N // imgs
    WIDE = imgs * LSPAN

    # Layout glue: NCHW -> zero-padded, channels-first, flattened (G, C, imgs*F);
    # every image interior is lane-aligned at its own i*F + BASE offset.
    xp = jnp.pad(x, ((0, 0), (0, 0), (P, P), (P, P)))            # (N, C, HP, WP)
    xf = jnp.pad(xp.reshape(N, C, HP * WP),
                 ((0, 0), (0, 0), (LEAD, F - LEAD - HP * WP)))   # (N, C, F)
    xg = xf.reshape(G, imgs, C, F).transpose(0, 2, 1, 3).reshape(G, C, imgs * F)

    # 0/1 mask of real pixels vs pad columns inside the flat interior span(s).
    j = jnp.arange(WIDE, dtype=jnp.int32)
    mask = ((j % WP) < W).astype(jnp.float32)[None, :]           # (1, WIDE)

    # Pre-packed, lane-dense weights: each stage is ONE (rows, 18*C) matmul.
    wa = _block_diag(_pack_taps(p["d1_w1"]), _pack_taps(p["d2_w1"]))   # (2C, 18C)
    wb = _block_diag(_pack_taps(p["d1_w2"]), _pack_taps(p["d2_w2"]))   # (2C, 18C)
    wc = _pack_taps(p["agg_w"])                                        # (C,  18C)
    wa = wa.astype(matmul_dtype)
    wb = wb.astype(matmul_dtype)
    wc = wc.astype(matmul_dtype)
    ba = jnp.concatenate([p["d1_b1"], p["d2_b1"]], axis=0)             # (2C, 1)
    bb = jnp.concatenate([p["d1_b2"], p["d2_b2"]], axis=0)             # (2C, 1)
    bc = p["agg_b"]                                                    # (C, 1)

    kernel = _make_merge_run_kernel(H, W, C, imgs, matmul_dtype)

    def full(a):
        return pl.BlockSpec(a.shape, lambda g: (0,) * a.ndim)

    out_flat = pl.pallas_call(
        kernel,
        out_shape=jax.ShapeDtypeStruct((G, c_out, WIDE), x.dtype),
        grid=(G,),
        in_specs=[pl.BlockSpec((None, C, imgs * F), lambda g: (g, 0, 0)),  # x
                  full(mask),
                  full(wa), full(ba), full(wb), full(bb), full(wc), full(bc)],
        out_specs=pl.BlockSpec((None, c_out, WIDE), lambda g: (g, 0, 0)),
        scratch_shapes=[pltpu.VMEM((2 * c_out, imgs * F), jnp.float32),   # branches
                        pltpu.VMEM((18 * C, WIDE), matmul_dtype)],        # patch
        compiler_params=pltpu.CompilerParams(
            dimension_semantics=("parallel",)),
    )(xg, mask, wa, ba, wb, bb, wc, bc)

    # Un-flatten: (G, C, imgs*LSPAN) -> (N, C, H, WP) -> drop the pad columns.
    out = (out_flat.reshape(G, c_out, imgs, LSPAN)
           .transpose(0, 2, 1, 3)
           .reshape(N, c_out, H, WP)[:, :, :, :W])
    return out


# ---------------- pure-JAX reference (correctness check only) -----------------

def _ref_conv(x, w, b, d, relu=True):
    cout, cin = w.shape[1], w.shape[2]
    w4 = jnp.transpose(w.reshape(3, 3, cout, cin), (2, 3, 0, 1))   # OIHW
    y = jax.lax.conv_general_dilated(
        x, w4, window_strides=(1, 1),
        padding=[(d, d), (d, d)], rhs_dilation=(d, d),
        dimension_numbers=("NCHW", "OIHW", "NCHW"))
    y = y + b.reshape(1, cout, 1, 1)
    return jnp.maximum(y, 0.0) if relu else y


def _ref_merge_run_nchw(x, p):
    b1 = _ref_conv(x, p["d1_w1"], p["d1_b1"], 1)
    b1 = _ref_conv(b1, p["d1_w2"], p["d1_b2"], 2)
    b2 = _ref_conv(x, p["d2_w1"], p["d2_b1"], 3)
    b2 = _ref_conv(b2, p["d2_w2"], p["d2_b2"], 4)
    cat = jnp.concatenate([b1, b2], axis=1)
    return _ref_conv(cat, p["agg_w"], p["agg_b"], 1) + x


if __name__ == "__main__":
    key = jax.random.PRNGKey(0)
    k_x, k_p, k_x2 = jax.random.split(key, 3)

    N, C, H, W = 2, 4, 16, 16                     # NCHW, like the PyTorch module
    x = jax.random.normal(k_x, (N, C, H, W), jnp.float32)
    params = init_merge_run_params(k_p, in_channels=C, out_channels=C)

    # Main check (imgs_per_step auto -> 1, two parallel grid steps).
    out = jax.block_until_ready(merge_run_nchw(x, params))
    assert out.shape == (N, C, H, W) and out.dtype == jnp.float32
    ref = jax.block_until_ready(_ref_merge_run_nchw(x, params))
    assert jnp.allclose(out, ref, rtol=1e-4, atol=1e-4), "mismatch vs reference"

    # Also exercise the image lane-stacking path (N=4 -> 2 grid steps x 2 images).
    x4 = jax.random.normal(k_x2, (4, C, H, W), jnp.float32)
    out4 = jax.block_until_ready(merge_run_nchw(x4, params))
    ref4 = jax.block_until_ready(_ref_merge_run_nchw(x4, params))
    assert jnp.allclose(out4, ref4, rtol=1e-4, atol=1e-4), "stacked-path mismatch"

    print("KERNEL_OK")
</pallas_src>

<mosaic_0001>
module attributes {stable_mosaic.version = 11 : i64} {
  func.func @kernel(%arg0: i32, %arg1: memref<1x4x640xf32, #tpu.memory_space<vmem>>, %arg2: memref<1x384xf32, #tpu.memory_space<vmem>>, %arg3: memref<8x72xf32, #tpu.memory_space<vmem>>, %arg4: memref<8x1xf32, #tpu.memory_space<vmem>>, %arg5: memref<8x72xf32, #tpu.memory_space<vmem>>, %arg6: memref<8x1xf32, #tpu.memory_space<vmem>>, %arg7: memref<4x72xf32, #tpu.memory_space<vmem>>, %arg8: memref<4x1xf32, #tpu.memory_space<vmem>>, %arg9: memref<1x4x384xf32, #tpu.memory_space<vmem>>, %arg10: memref<8x640xf32, #tpu.memory_space<vmem>>, %arg11: memref<72x384xf32, #tpu.memory_space<vmem>>) attributes {dimension_semantics = [#tpu.dimension_semantics<parallel>], iteration_bounds = array<i64: 2>, scalar_prefetch = 0 : i64, scratch_operands = 2 : i64, tpu.core_type = #tpu.core_type<tc>, window_params = [{transform_indices = @transform_0, window_bounds = array<i64: 1, 4, 640>}, {pipeline_mode = #tpu.pipeline_mode<synchronous>, transform_indices = @transform_1, window_bounds = array<i64: 1, 384>}, {pipeline_mode = #tpu.pipeline_mode<synchronous>, transform_indices = @transform_2, window_bounds = array<i64: 8, 72>}, {pipeline_mode = #tpu.pipeline_mode<synchronous>, transform_indices = @transform_3, window_bounds = array<i64: 8, 1>}, {pipeline_mode = #tpu.pipeline_mode<synchronous>, transform_indices = @transform_4, window_bounds = array<i64: 8, 72>}, {pipeline_mode = #tpu.pipeline_mode<synchronous>, transform_indices = @transform_5, window_bounds = array<i64: 8, 1>}, {pipeline_mode = #tpu.pipeline_mode<synchronous>, transform_indices = @transform_6, window_bounds = array<i64: 4, 72>}, {pipeline_mode = #tpu.pipeline_mode<synchronous>, transform_indices = @transform_7, window_bounds = array<i64: 4, 1>}, {transform_indices = @transform_8, window_bounds = array<i64: 1, 4, 384>}]} {
    %cst = arith.constant 0.000000e+00 : f32
    %0 = vector.broadcast %cst : f32 to vector<8x128xf32>
    %c0 = arith.constant 0 : index
    %c0_0 = arith.constant 0 : index
    %1 = vector.load %arg10[%c0, %c0_0] : memref<8x640xf32, #tpu.memory_space<vmem>>, vector<8x128xf32>
    tpu.vector_store %arg10[%c0, %c0_0], %0 {strides = array<i32>} : memref<8x640xf32, #tpu.memory_space<vmem>>, vector<8x128xf32>,
    %cst_1 = arith.constant 0.000000e+00 : f32
    %2 = vector.broadcast %cst_1 : f32 to vector<8x128xf32>
    %c0_2 = arith.constant 0 : index
    %c512 = arith.constant 512 : index
    %3 = vector.load %arg10[%c0_2, %c512] : memref<8x640xf32, #tpu.memory_space<vmem>>, vector<8x128xf32>
    tpu.vector_store %arg10[%c0_2, %c512], %2 {strides = array<i32>} : memref<8x640xf32, #tpu.memory_space<vmem>>, vector<8x128xf32>,
    %c0_3 = arith.constant 0 : index
    %c0_4 = arith.constant 0 : index
    %4 = vector.load %arg2[%c0_3, %c0_4] : memref<1x384xf32, #tpu.memory_space<vmem>>, vector<1x384xf32>
    %5 = vector.shape_cast %4 : vector<1x384xf32> to vector<1x384xf32>
    %6 = vector.broadcast %5 : vector<1x384xf32> to vector<8x384xf32>
    %c0_5 = arith.constant 0 : index
    %c0_6 = arith.constant 0 : index
    %c103 = arith.constant 103 : index
    %7 = vector.load %arg1[%c0_5, %c0_6, %c103] : memref<1x4x640xf32, #tpu.memory_space<vmem>>, vector<1x4x384xf32>
    %8 = vector.shape_cast %7 : vector<1x4x384xf32> to vector<4x384xf32>
    %c0_7 = arith.constant 0 : index
    %c0_8 = arith.constant 0 : index
    %9 = vector.load %arg11[%c0_7, %c0_8] : memref<72x384xf32, #tpu.memory_space<vmem>>, vector<4x384xf32>
    tpu.vector_store %arg11[%c0_7, %c0_8], %8 {strides = array<i32>} : memref<72x384xf32, #tpu.memory_space<vmem>>, vector<4x384xf32>,
    %c0_9 = arith.constant 0 : index
    %c0_10 = arith.constant 0 : index
    %c104 = arith.constant 104 : index
    %10 = vector.load %arg1[%c0_9, %c0_10, %c104] : memref<1x4x640xf32, #tpu.memory_space<vmem>>, vector<1x4x384xf32>
    %11 = vector.shape_cast %10 : vector<1x4x384xf32> to vector<4x384xf32>
    %c4 = arith.constant 4 : index
    %c0_11 = arith.constant 0 : index
    %12 = vector.load %arg11[%c4, %c0_11] : memref<72x384xf32, #tpu.memory_space<vmem>>, vector<4x384xf32>
    tpu.vector_store %arg11[%c4, %c0_11], %11 {strides = array<i32>} : memref<72x384xf32, #tpu.memory_space<vmem>>, vector<4x384xf32>,
    %c0_12 = arith.constant 0 : index
    %c0_13 = arith.constant 0 : index
    %c105 = arith.constant 105 : index
    %13 = vector.load %arg1[%c0_12, %c0_13, %c105] : memref<1x4x640xf32, #tpu.memory_space<vmem>>, vector<1x4x384xf32>
    %14 = vector.shape_cast %13 : vector<1x4x384xf32> to vector<4x384xf32>
    %c8 = arith.constant 8 : index
    %c0_14 = arith.constant 0 : index
    %15 = vector.load %arg11[%c8, %c0_14] : memref<72x384xf32, #tpu.memory_space<vmem>>, vector<4x384xf32>
    tpu.vector_store %arg11[%c8, %c0_14], %14 {strides = array<i32>} : memref<72x384xf32, #tpu.memory_space<vmem>>, vector<4x384xf32>,
    %c0_15 = arith.constant 0 : index
    %c0_16 = arith.constant 0 : index
    %c127 = arith.constant 127 : index
    %16 = vector.load %arg1[%c0_15, %c0_16, %c127] : memref<1x4x640xf32, #tpu.memory_space<vmem>>, vector<1x4x384xf32>
    %17 = vector.shape_cast %16 : vector<1x4x384xf32> to vector<4x384xf32>
    %c12 = arith.constant 12 : index
    %c0_17 = arith.constant 0 : index
    %18 = vector.load %arg11[%c12, %c0_17] : memref<72x384xf32, #tpu.memory_space<vmem>>, vector<4x384xf32>
    tpu.vector_store %arg11[%c12, %c0_17], %17 {strides = array<i32>} : memref<72x384xf32, #tpu.memory_space<vmem>>, vector<4x384xf32>,
    %c0_18 = arith.constant 0 : index
    %c0_19 = arith.constant 0 : index
    %c128 = arith.constant 128 : index
    %19 = vector.load %arg1[%c0_18, %c0_19, %c128] : memref<1x4x640xf32, #tpu.memory_space<vmem>>, vector<1x4x384xf32>
    %20 = vector.shape_cast %19 : vector<1x4x384xf32> to vector<4x384xf32>
    %c16 = arith.constant 16 : index
    %c0_20 = arith.constant 0 : index
    %21 = vector.load %arg11[%c16, %c0_20] : memref<72x384xf32, #tpu.memory_space<vmem>>, vector<4x384xf32>
    tpu.vector_store %arg11[%c16, %c0_20], %20 {strides = array<i32>} : memref<72x384xf32, #tpu.memory_space<vmem>>, vector<4x384xf32>,
    %c0_21 = arith.constant 0 : index
    %c0_22 = arith.constant 0 : index
    %c129 = arith.constant 129 : index
    %22 = vector.load %arg1[%c0_21, %c0_22, %c129] : memref<1x4x640xf32, #tpu.memory_space<vmem>>, vector<1x4x384xf32>
    %23 = vector.shape_cast %22 : vector<1x4x384xf32> to vector<4x384xf32>
    %c20 = arith.constant 20 : index
    %c0_23 = arith.constant 0 : index
    %24 = vector.load %arg11[%c20, %c0_23] : memref<72x384xf32, #tpu.memory_space<vmem>>, vector<4x384xf32>
    tpu.vector_store %arg11[%c20, %c0_23], %23 {strides = array<i32>} : memref<72x384xf32, #tpu.memory_space<vmem>>, vector<4x384xf32>,
    %c0_24 = arith.constant 0 : index
    %c0_25 = arith.constant 0 : index
    %c151 = arith.constant 151 : index
    %25 = vector.load %arg1[%c0_24, %c0_25, %c151] : memref<1x4x640xf32, #tpu.memory_space<vmem>>, vector<1x4x384xf32>
    %26 = vector.shape_cast %25 : vector<1x4x384xf32> to vector<4x384xf32>
    %c24 = arith.constant 24 : index
    %c0_26 = arith.constant 0 : index
    %27 = vector.load %arg11[%c24, %c0_26] : memref<72x384xf32, #tpu.memory_space<vmem>>, vector<4x384xf32>
    tpu.vector_store %arg11[%c24, %c0_26], %26 {strides = array<i32>} : memref<72x384xf32, #tpu.memory_space<vmem>>, vector<4x384xf32>,
    %c0_27 = arith.constant 0 : index
    %c0_28 = arith.constant 0 : index
    %c152 = arith.constant 152 : index
    %28 = vector.load %arg1[%c0_27, %c0_28, %c152] : memref<1x4x640xf32, #tpu.memory_space<vmem>>, vector<1x4x384xf32>
    %29 = vector.shape_cast %28 : vector<1x4x384xf32> to vector<4x384xf32>
    %c28 = arith.constant 28 : index
    %c0_29 = arith.constant 0 : index
    %30 = vector.load %arg11[%c28, %c0_29] : memref<72x384xf32, #tpu.memory_space<vmem>>, vector<4x384xf32>
    tpu.vector_store %arg11[%c28, %c0_29], %29 {strides = array<i32>} : memref<72x384xf32, #tpu.memory_space<vmem>>, vector<4x384xf32>,
    %c0_30 = arith.constant 0 : index
    %c0_31 = arith.constant 0 : index
    %c153 = arith.constant 153 : index
    %31 = vector.load %arg1[%c0_30, %c0_31, %c153] : memref<1x4x640xf32, #tpu.memory_space<vmem>>, vector<1x4x384xf32>
    %32 = vector.shape_cast %31 : vector<1x4x384xf32> to vector<4x384xf32>
    %c32 = arith.constant 32 : index
    %c0_32 = arith.constant 0 : index
    %33 = vector.load %arg11[%c32, %c0_32] : memref<72x384xf32, #tpu.memory_space<vmem>>, vector<4x384xf32>
    tpu.vector_store %arg11[%c32, %c0_32], %32 {strides = array<i32>} : memref<72x384xf32, #tpu.memory_space<vmem>>, vector<4x384xf32>,
    %c0_33 = arith.constant 0 : index
    %c0_34 = arith.constant 0 : index
    %c53 = arith.constant 53 : index
    %34 = vector.load %arg1[%c0_33, %c0_34, %c53] : memref<1x4x640xf32, #tpu.memory_space<vmem>>, vector<1x4x384xf32>
    %35 = vector.shape_cast %34 : vector<1x4x384xf32> to vector<4x384xf32>
    %c36 = arith.constant 36 : index
    %c0_35 = arith.constant 0 : index
    %36 = vector.load %arg11[%c36, %c0_35] : memref<72x384xf32, #tpu.memory_space<vmem>>, vector<4x384xf32>
    tpu.vector_store %arg11[%c36, %c0_35], %35 {strides = array<i32>} : memref<72x384xf32, #tpu.memory_space<vmem>>, vector<4x384xf32>,
    %c0_36 = arith.constant 0 : index
    %c0_37 = arith.constant 0 : index
    %c56 = arith.constant 56 : index
    %37 = vector.load %arg1[%c0_36, %c0_37, %c56] : memref<1x4x640xf32, #tpu.memory_space<vmem>>, vector<1x4x384xf32>
    %38 = vector.shape_cast %37 : vector<1x4x384xf32> to vector<4x384xf32>
    %c40 = arith.constant 40 : index
    %c0_38 = arith.constant 0 : index
    %39 = vector.load %arg11[%c40, %c0_38] : memref<72x384xf32, #tpu.memory_space<vmem>>, vector<4x384xf32>
    tpu.vector_store %arg11[%c40, %c0_38], %38 {strides = array<i32>} : memref<72x384xf32, #tpu.memory_space<vmem>>, vector<4x384xf32>,
    %c0_39 = arith.constant 0 : index
    %c0_40 = arith.constant 0 : index
    %c59 = arith.constant 59 : index
    %40 = vector.load %arg1[%c0_39, %c0_40, %c59] : memref<1x4x640xf32, #tpu.memory_space<vmem>>, vector<1x4x384xf32>
    %41 = vector.shape_cast %40 : vector<1x4x384xf32> to vector<4x384xf32>
    %c44 = arith.constant 44 : index
    %c0_41 = arith.constant 0 : index
    %42 = vector.load %arg11[%c44, %c0_41] : memref<72x384xf32, #tpu.memory_space<vmem>>, vector<4x384xf32>
    tpu.vector_store %arg11[%c44, %c0_41], %41 {strides = array<i32>} : memref<72x384xf32, #tpu.memory_space<vmem>>, vector<4x384xf32>,
    %c0_42 = arith.constant 0 : index
    %c0_43 = arith.constant 0 : index
    %c125 = arith.constant 125 : index
    %43 = vector.load %arg1[%c0_42, %c0_43, %c125] : memref<1x4x640xf32, #tpu.memory_space<vmem>>, vector<1x4x384xf32>
    %44 = vector.shape_cast %43 : vector<1x4x384xf32> to vector<4x384xf32>
    %c48 = arith.constant 48 : index
    %c0_44 = arith.constant 0 : index
    %45 = vector.load %arg11[%c48, %c0_44] : memref<72x384xf32, #tpu.memory_space<vmem>>, vector<4x384xf32>
    tpu.vector_store %arg11[%c48, %c0_44], %44 {strides = array<i32>} : memref<72x384xf32, #tpu.memory_space<vmem>>, vector<4x384xf32>,
    %c0_45 = arith.constant 0 : index
    %c0_46 = arith.constant 0 : index
    %c128_47 = arith.constant 128 : index
    %46 = vector.load %arg1[%c0_45, %c0_46, %c128_47] : memref<1x4x640xf32, #tpu.memory_space<vmem>>, vector<1x4x384xf32>
    %47 = vector.shape_cast %46 : vector<1x4x384xf32> to vector<4x384xf32>
    %c52 = arith.constant 52 : index
    %c0_48 = arith.constant 0 : index
    %48 = vector.load %arg11[%c52, %c0_48] : memref<72x384xf32, #tpu.memory_space<vmem>>, vector<4x384xf32>
    tpu.vector_store %arg11[%c52, %c0_48], %47 {strides = array<i32>} : memref<72x384xf32, #tpu.memory_space<vmem>>, vector<4x384xf32>,
    %c0_49 = arith.constant 0 : index
    %c0_50 = arith.constant 0 : index
    %c131 = arith.constant 131 : index
    %49 = vector.load %arg1[%c0_49, %c0_50, %c131] : memref<1x4x640xf32, #tpu.memory_space<vmem>>, vector<1x4x384xf32>
    %50 = vector.shape_cast %49 : vector<1x4x384xf32> to vector<4x384xf32>
    %c56_51 = arith.constant 56 : index
    %c0_52 = arith.constant 0 : index
    %51 = vector.load %arg11[%c56_51, %c0_52] : memref<72x384xf32, #tpu.memory_space<vmem>>, vector<4x384xf32>
    tpu.vector_store %arg11[%c56_51, %c0_52], %50 {strides = array<i32>} : memref<72x384xf32, #tpu.memory_space<vmem>>, vector<4x384xf32>,
    %c0_53 = arith.constant 0 : index
    %c0_54 = arith.constant 0 : index
    %c197 = arith.constant 197 : index
    %52 = vector.load %arg1[%c0_53, %c0_54, %c197] : memref<1x4x640xf32, #tpu.memory_space<vmem>>, vector<1x4x384xf32>
    %53 = vector.shape_cast %52 : vector<1x4x384xf32> to vector<4x384xf32>
    %c60 = arith.constant 60 : index
    %c0_55 = arith.constant 0 : index
    %54 = vector.load %arg11[%c60, %c0_55] : memref<72x384xf32, #tpu.memory_space<vmem>>, vector<4x384xf32>
    tpu.vector_store %arg11[%c60, %c0_55], %53 {strides = array<i32>} : memref<72x384xf32, #tpu.memory_space<vmem>>, vector<4x384xf32>,
    %c0_56 = arith.constant 0 : index
    %c0_57 = arith.constant 0 : index
    %c200 = arith.constant 200 : index
    %55 = vector.load %arg1[%c0_56, %c0_57, %c200] : memref<1x4x640xf32, #tpu.memory_space<vmem>>, vector<1x4x384xf32>
    %56 = vector.shape_cast %55 : vector<1x4x384xf32> to vector<4x384xf32>
    %c64 = arith.constant 64 : index
    %c0_58 = arith.constant 0 : index
    %57 = vector.load %arg11[%c64, %c0_58] : memref<72x384xf32, #tpu.memory_space<vmem>>, vector<4x384xf32>
    tpu.vector_store %arg11[%c64, %c0_58], %56 {strides = array<i32>} : memref<72x384xf32, #tpu.memory_space<vmem>>, vector<4x384xf32>,
    %c0_59 = arith.constant 0 : index
    %c0_60 = arith.constant 0 : index
    %c203 = arith.constant 203 : index
    %58 = vector.load %arg1[%c0_59, %c0_60, %c203] : memref<1x4x640xf32, #tpu.memory_space<vmem>>, vector<1x4x384xf32>
    %59 = vector.shape_cast %58 : vector<1x4x384xf32> to vector<4x384xf32>
    %c68 = arith.constant 68 : index
    %c0_61 = arith.constant 0 : index
    %60 = vector.load %arg11[%c68, %c0_61] : memref<72x384xf32, #tpu.memory_space<vmem>>, vector<4x384xf32>
    tpu.vector_store %arg11[%c68, %c0_61], %59 {strides = array<i32>} : memref<72x384xf32, #tpu.memory_space<vmem>>, vector<4x384xf32>,
    %c0_62 = arith.constant 0 : index
    %c0_63 = arith.constant 0 : index
    %61 = vector.load %arg3[%c0_62, %c0_63] : memref<8x72xf32, #tpu.memory_space<vmem>>, vector<8x72xf32>
    %c0_64 = arith.constant 0 : index
    %c0_65 = arith.constant 0 : index
    %62 = vector.load %arg11[%c0_64, %c0_65] : memref<72x384xf32, #tpu.memory_space<vmem>>, vector<72x384xf32>
    %cst_66 = arith.constant dense<0.000000e+00> : vector<8x384xf32>
    %63 = tpu.matmul %61, %62, %cst_66 {dimension_numbers = #tpu.dot_dimension_numbers<[1], [0], [0], [1], [0, 0, 1, 1], [], []>} : vector<8x72xf32>, vector<72x384xf32>, vector<8x384xf32> -> vector<8x384xf32>
    %c0_67 = arith.constant 0 : index
    %c0_68 = arith.constant 0 : index
    %64 = vector.load %arg4[%c0_67, %c0_68] : memref<8x1xf32, #tpu.memory_space<vmem>>, vector<8x1xf32>
    %65 = vector.broadcast %64 : vector<8x1xf32> to vector<8x384xf32>
    %66 = arith.addf %63, %65 : vector<8x384xf32>
    %cst_69 = arith.constant 0.000000e+00 : f32
    %67 = vector.broadcast %cst_69 : f32 to vector<8x384xf32>
    %68 = arith.maximumf %66, %67 : vector<8x384xf32>
    %69 = arith.mulf %68, %6 : vector<8x384xf32>
    %c0_70 = arith.constant 0 : index
    %c128_71 = arith.constant 128 : index
    %70 = vector.load %arg10[%c0_70, %c128_71] : memref<8x640xf32, #tpu.memory_space<vmem>>, vector<8x384xf32>
    tpu.vector_store %arg10[%c0_70, %c128_71], %69 {strides = array<i32>} : memref<8x640xf32, #tpu.memory_space<vmem>>, vector<8x384xf32>,
    %c0_72 = arith.constant 0 : index
    %c78 = arith.constant 78 : index
    %71 = vector.load %arg10[%c0_72, %c78] : memref<8x640xf32, #tpu.memory_space<vmem>>, vector<4x384xf32>
    %c0_73 = arith.constant 0 : index
    %c0_74 = arith.constant 0 : index
    %72 = vector.load %arg11[%c0_73, %c0_74] : memref<72x384xf32, #tpu.memory_space<vmem>>, vector<4x384xf32>
    tpu.vector_store %arg11[%c0_73, %c0_74], %71 {strides = array<i32>} : memref<72x384xf32, #tpu.memory_space<vmem>>, vector<4x384xf32>,
    %c0_75 = arith.constant 0 : index
    %c80 = arith.constant 80 : index
    %73 = vector.load %arg10[%c0_75, %c80] : memref<8x640xf32, #tpu.memory_space<vmem>>, vector<4x384xf32>
    %c4_76 = arith.constant 4 : index
    %c0_77 = arith.constant 0 : index
    %74 = vector.load %arg11[%c4_76, %c0_77] : memref<72x384xf32, #tpu.memory_space<vmem>>, vector<4x384xf32>
    tpu.vector_store %arg11[%c4_76, %c0_77], %73 {strides = array<i32>} : memref<72x384xf32, #tpu.memory_space<vmem>>, vector<4x384xf32>,
    %c0_78 = arith.constant 0 : index
    %c82 = arith.constant 82 : index
    %75 = vector.load %arg10[%c0_78, %c82] : memref<8x640xf32, #tpu.memory_space<vmem>>, vector<4x384xf32>
    %c8_79 = arith.constant 8 : index
    %c0_80 = arith.constant 0 : index
    %76 = vector.load %arg11[%c8_79, %c0_80] : memref<72x384xf32, #tpu.memory_space<vmem>>, vector<4x384xf32>
    tpu.vector_store %arg11[%c8_79, %c0_80], %75 {strides = array<i32>} : memref<72x384xf32, #tpu.memory_space<vmem>>, vector<4x384xf32>,
    %c0_81 = arith.constant 0 : index
    %c126 = arith.constant 126 : index
    %77 = vector.load %arg10[%c0_81, %c126] : memref<8x640xf32, #tpu.memory_space<vmem>>, vector<4x384xf32>
    %c12_82 = arith.constant 12 : index
    %c0_83 = arith.constant 0 : index
    %78 = vector.load %arg11[%c12_82, %c0_83] : memref<72x384xf32, #tpu.memory_space<vmem>>, vector<4x384xf32>
    tpu.vector_store %arg11[%c12_82, %c0_83], %77 {strides = array<i32>} : memref<72x384xf32, #tpu.memory_space<vmem>>, vector<4x384xf32>,
    %c0_84 = arith.constant 0 : index
    %c128_85 = arith.constant 128 : index
    %79 = vector.load %arg10[%c0_84, %c128_85] : memref<8x640xf32, #tpu.memory_space<vmem>>, vector<4x384xf32>
    %c16_86 = arith.constant 16 : index
    %c0_87 = arith.constant 0 : index
    %80 = vector.load %arg11[%c16_86, %c0_87] : memref<72x384xf32, #tpu.memory_space<vmem>>, vector<4x384xf32>
    tpu.vector_store %arg11[%c16_86, %c0_87], %79 {strides = array<i32>} : memref<72x384xf32, #tpu.memory_space<vmem>>, vector<4x384xf32>,
    %c0_88 = arith.constant 0 : index
    %c130 = arith.constant 130 : index
    %81 = vector.load %arg10[%c0_88, %c130] : memref<8x640xf32, #tpu.memory_space<vmem>>, vector<4x384xf32>
    %c20_89 = arith.constant 20 : index
    %c0_90 = arith.constant 0 : index
    %82 = vector.load %arg11[%c20_89, %c0_90] : memref<72x384xf32, #tpu.memory_space<vmem>>, vector<4x384xf32>
    tpu.vector_store %arg11[%c20_89, %c0_90], %81 {strides = array<i32>} : memref<72x384xf32, #tpu.memory_space<vmem>>, vector<4x384xf32>,
    %c0_91 = arith.constant 0 : index
    %c174 = arith.constant 174 : index
    %83 = vector.load %arg10[%c0_91, %c174] : memref<8x640xf32, #tpu.memory_space<vmem>>, vector<4x384xf32>
    %c24_92 = arith.constant 24 : index
    %c0_93 = arith.constant 0 : index
    %84 = vector.load %arg11[%c24_92, %c0_93] : memref<72x384xf32, #tpu.memory_space<vmem>>, vector<4x384xf32>
    tpu.vector_store %arg11[%c24_92, %c0_93], %83 {strides = array<i32>} : memref<72x384xf32, #tpu.memory_space<vmem>>, vector<4x384xf32>,
    %c0_94 = arith.constant 0 : index
    %c176 = arith.constant 176 : index
    %85 = vector.load %arg10[%c0_94, %c176] : memref<8x640xf32, #tpu.memory_space<vmem>>, vector<4x384xf32>
    %c28_95 = arith.constant 28 : index
    %c0_96 = arith.constant 0 : index
    %86 = vector.load %arg11[%c28_95, %c0_96] : memref<72x384xf32, #tpu.memory_space<vmem>>, vector<4x384xf32>
    tpu.vector_store %arg11[%c28_95, %c0_96], %85 {strides = array<i32>} : memref<72x384xf32, #tpu.memory_space<vmem>>, vector<4x384xf32>,
    %c0_97 = arith.constant 0 : index
    %c178 = arith.constant 178 : index
    %87 = vector.load %arg10[%c0_97, %c178] : memref<8x640xf32, #tpu.memory_space<vmem>>, vector<4x384xf32>
    %c32_98 = arith.constant 32 : index
    %c0_99 = arith.constant 0 : index
    %88 = vector.load %arg11[%c32_98, %c0_99] : memref<72x384xf32, #tpu.memory_space<vmem>>, vector<4x384xf32>
    tpu.vector_store %arg11[%c32_98, %c0_99], %87 {strides = array<i32>} : memref<72x384xf32, #tpu.memory_space<vmem>>, vector<4x384xf32>,
    %c4_100 = arith.constant 4 : index
    %c28_101 = arith.constant 28 : index
    %89 = vector.load %arg10[%c4_100, %c28_101] : memref<8x640xf32, #tpu.memory_space<vmem>>, vector<4x384xf32>
    %c36_102 = arith.constant 36 : index
    %c0_103 = arith.constant 0 : index
    %90 = vector.load %arg11[%c36_102, %c0_103] : memref<72x384xf32, #tpu.memory_space<vmem>>, vector<4x384xf32>
    tpu.vector_store %arg11[%c36_102, %c0_103], %89 {strides = array<i32>} : memref<72x384xf32, #tpu.memory_space<vmem>>, vector<4x384xf32>,
    %c4_104 = arith.constant 4 : index
    %c32_105 = arith.constant 32 : index
    %91 = vector.load %arg10[%c4_104, %c32_105] : memref<8x640xf32, #tpu.memory_space<vmem>>, vector<4x384xf32>
    %c40_106 = arith.constant 40 : index
    %c0_107 = arith.constant 0 : index
    %92 = vector.load %arg11[%c40_106, %c0_107] : memref<72x384xf32, #tpu.memory_space<vmem>>, vector<4x384xf32>
    tpu.vector_store %arg11[%c40_106, %c0_107], %91 {strides = array<i32>} : memref<72x384xf32, #tpu.memory_space<vmem>>, vector<4x384xf32>,
    %c4_108 = arith.constant 4 : index
    %c36_109 = arith.constant 36 : index
    %93 = vector.load %arg10[%c4_108, %c36_109] : memref<8x640xf32, #tpu.memory_space<vmem>>, vector<4x384xf32>
    %c44_110 = arith.constant 44 : index
    %c0_111 = arith.constant 0 : index
    %94 = vector.load %arg11[%c44_110, %c0_111] : memref<72x384xf32, #tpu.memory_space<vmem>>, vector<4x384xf32>
    tpu.vector_store %arg11[%c44_110, %c0_111], %93 {strides = array<i32>} : memref<72x384xf32, #tpu.memory_space<vmem>>, vector<4x384xf32>,
    %c4_112 = arith.constant 4 : index
    %c124 = arith.constant 124 : index
    %95 = vector.load %arg10[%c4_112, %c124] : memref<8x640xf32, #tpu.memory_space<vmem>>, vector<4x384xf32>
    %c48_113 = arith.constant 48 : index
    %c0_114 = arith.constant 0 : index
    %96 = vector.load %arg11[%c48_113, %c0_114] : memref<72x384xf32, #tpu.memory_space<vmem>>, vector<4x384xf32>
    tpu.vector_store %arg11[%c48_113, %c0_114], %95 {strides = array<i32>} : memref<72x384xf32, #tpu.memory_space<vmem>>, vector<4x384xf32>,
    %c4_115 = arith.constant 4 : index
    %c128_116 = arith.constant 128 : index
    %97 = vector.load %arg10[%c4_115, %c128_116] : memref<8x640xf32, #tpu.memory_space<vmem>>, vector<4x384xf32>
    %c52_117 = arith.constant 52 : index
    %c0_118 = arith.constant 0 : index
    %98 = vector.load %arg11[%c52_117, %c0_118] : memref<72x384xf32, #tpu.memory_space<vmem>>, vector<4x384xf32>
    tpu.vector_store %arg11[%c52_117, %c0_118], %97 {strides = array<i32>} : memref<72x384xf32, #tpu.memory_space<vmem>>, vector<4x384xf32>,
    %c4_119 = arith.constant 4 : index
    %c132 = arith.constant 132 : index
    %99 = vector.load %arg10[%c4_119, %c132] : memref<8x640xf32, #tpu.memory_space<vmem>>, vector<4x384xf32>
    %c56_120 = arith.constant 56 : index
    %c0_121 = arith.constant 0 : index
    %100 = vector.load %arg11[%c56_120, %c0_121] : memref<72x384xf32, #tpu.memory_space<vmem>>, vector<4x384xf32>
    tpu.vector_store %arg11[%c56_120, %c0_121], %99 {strides = array<i32>} : memref<72x384xf32, #tpu.memory_space<vmem>>, vector<4x384xf32>,
    %c4_122 = arith.constant 4 : index
    %c220 = arith.constant 220 : index
    %101 = vector.load %arg10[%c4_122, %c220] : memref<8x640xf32, #tpu.memory_space<vmem>>, vector<4x384xf32>
    %c60_123 = arith.constant 60 : index
    %c0_124 = arith.constant 0 : index
    %102 = vector.load %arg11[%c60_123, %c0_124] : memref<72x384xf32, #tpu.memory_space<vmem>>, vector<4x384xf32>
    tpu.vector_store %arg11[%c60_123, %c0_124], %101 {strides = array<i32>} : memref<72x384xf32, #tpu.memory_space<vmem>>, vector<4x384xf32>,
    %c4_125 = arith.constant 4 : index
    %c224 = arith.constant 224 : index
    %103 = vector.load %arg10[%c4_125, %c224] : memref<8x640xf32, #tpu.memory_space<vmem>>, vector<4x384xf32>
    %c64_126 = arith.constant 64 : index
    %c0_127 = arith.constant 0 : index
    %104 = vector.load %arg11[%c64_126, %c0_127] : memref<72x384xf32, #tpu.memory_space<vmem>>, vector<4x384xf32>
    tpu.vector_store %arg11[%c64_126, %c0_127], %103 {strides = array<i32>} : memref<72x384xf32, #tpu.memory_space<vmem>>, vector<4x384xf32>,
    %c4_128 = arith.constant 4 : index
    %c228 = arith.constant 228 : index
    %105 = vector.load %arg10[%c4_128, %c228] : memref<8x640xf32, #tpu.memory_space<vmem>>, vector<4x384xf32>
    %c68_129 = arith.constant 68 : index
    %c0_130 = arith.constant 0 : index
    %106 = vector.load %arg11[%c68_129, %c0_130] : memref<72x384xf32, #tpu.memory_space<vmem>>, vector<4x384xf32>
    tpu.vector_store %arg11[%c68_129, %c0_130], %105 {strides = array<i32>} : memref<72x384xf32, #tpu.memory_space<vmem>>, vector<4x384xf32>,
    %c0_131 = arith.constant 0 : index
    %c0_132 = arith.constant 0 : index
    %107 = vector.load %arg5[%c0_131, %c0_132] : memref<8x72xf32, #tpu.memory_space<vmem>>, vector<8x72xf32>
    %c0_133 = arith.constant 0 : index
    %c0_134 = arith.constant 0 : index
    %108 = vector.load %arg11[%c0_133, %c0_134] : memref<72x384xf32, #tpu.memory_space<vmem>>, vector<72x384xf32>
    %cst_135 = arith.constant dense<0.000000e+00> : vector<8x384xf32>
    %109 = tpu.matmul %107, %108, %cst_135 {dimension_numbers = #tpu.dot_dimension_numbers<[1], [0], [0], [1], [0, 0, 1, 1], [], []>} : vector<8x72xf32>, vector<72x384xf32>, vector<8x384xf32> -> vector<8x384xf32>
    %c0_136 = arith.constant 0 : index
    %c0_137 = arith.constant 0 : index
    %110 = vector.load %arg6[%c0_136, %c0_137] : memref<8x1xf32, #tpu.memory_space<vmem>>, vector<8x1xf32>
    %111 = vector.broadcast %110 : vector<8x1xf32> to vector<8x384xf32>
    %112 = arith.addf %109, %111 : vector<8x384xf32>
    %cst_138 = arith.constant 0.000000e+00 : f32
    %113 = vector.broadcast %cst_138 : f32 to vector<8x384xf32>
    %114 = arith.maximumf %112, %113 : vector<8x384xf32>
    %115 = arith.mulf %114, %6 : vector<8x384xf32>
    %c0_139 = arith.constant 0 : index
    %c128_140 = arith.constant 128 : index
    %116 = vector.load %arg10[%c0_139, %c128_140] : memref<8x640xf32, #tpu.memory_space<vmem>>, vector<8x384xf32>
    tpu.vector_store %arg10[%c0_139, %c128_140], %115 {strides = array<i32>} : memref<8x640xf32, #tpu.memory_space<vmem>>, vector<8x384xf32>,
    %c0_141 = arith.constant 0 : index
    %c103_142 = arith.constant 103 : index
    %117 = vector.load %arg10[%c0_141, %c103_142] : memref<8x640xf32, #tpu.memory_space<vmem>>, vector<8x384xf32>
    %c0_143 = arith.constant 0 : index
    %c0_144 = arith.constant 0 : index
    %118 = vector.load %arg11[%c0_143, %c0_144] : memref<72x384xf32, #tpu.memory_space<vmem>>, vector<8x384xf32>
    tpu.vector_store %arg11[%c0_143, %c0_144], %117 {strides = array<i32>} : memref<72x384xf32, #tpu.memory_space<vmem>>, vector<8x384xf32>,
    %c0_145 = arith.constant 0 : index
    %c104_146 = arith.constant 104 : index
    %119 = vector.load %arg10[%c0_145, %c104_146] : memref<8x640xf32, #tpu.memory_space<vmem>>, vector<8x384xf32>
    %c8_147 = arith.constant 8 : index
    %c0_148 = arith.constant 0 : index
    %120 = vector.load %arg11[%c8_147, %c0_148] : memref<72x384xf32, #tpu.memory_space<vmem>>, vector<8x384xf32>
    tpu.vector_store %arg11[%c8_147, %c0_148], %119 {strides = array<i32>} : memref<72x384xf32, #tpu.memory_space<vmem>>, vector<8x384xf32>,
    %c0_149 = arith.constant 0 : index
    %c105_150 = arith.constant 105 : index
    %121 = vector.load %arg10[%c0_149, %c105_150] : memref<8x640xf32, #tpu.memory_space<vmem>>, vector<8x384xf32>
    %c16_151 = arith.constant 16 : index
    %c0_152 = arith.constant 0 : index
    %122 = vector.load %arg11[%c16_151, %c0_152] : memref<72x384xf32, #tpu.memory_space<vmem>>, vector<8x384xf32>
    tpu.vector_store %arg11[%c16_151, %c0_152], %121 {strides = array<i32>} : memref<72x384xf32, #tpu.memory_space<vmem>>, vector<8x384xf32>,
    %c0_153 = arith.constant 0 : index
    %c127_154 = arith.constant 127 : index
    %123 = vector.load %arg10[%c0_153, %c127_154] : memref<8x640xf32, #tpu.memory_space<vmem>>, vector<8x384xf32>
    %c24_155 = arith.constant 24 : index
    %c0_156 = arith.constant 0 : index
    %124 = vector.load %arg11[%c24_155, %c0_156] : memref<72x384xf32, #tpu.memory_space<vmem>>, vector<8x384xf32>
    tpu.vector_store %arg11[%c24_155, %c0_156], %123 {strides = array<i32>} : memref<72x384xf32, #tpu.memory_space<vmem>>, vector<8x384xf32>,
    %c0_157 = arith.constant 0 : index
    %c128_158 = arith.constant 128 : index
    %125 = vector.load %arg10[%c0_157, %c128_158] : memref<8x640xf32, #tpu.memory_space<vmem>>, vector<8x384xf32>
    %c32_159 = arith.constant 32 : index
    %c0_160 = arith.constant 0 : index
    %126 = vector.load %arg11[%c32_159, %c0_160] : memref<72x384xf32, #tpu.memory_space<vmem>>, vector<8x384xf32>
    tpu.vector_store %arg11[%c32_159, %c0_160], %125 {strides = array<i32>} : memref<72x384xf32, #tpu.memory_space<vmem>>, vector<8x384xf32>,
    %c0_161 = arith.constant 0 : index
    %c129_162 = arith.constant 129 : index
    %127 = vector.load %arg10[%c0_161, %c129_162] : memref<8x640xf32, #tpu.memory_space<vmem>>, vector<8x384xf32>
    %c40_163 = arith.constant 40 : index
    %c0_164 = arith.constant 0 : index
    %128 = vector.load %arg11[%c40_163, %c0_164] : memref<72x384xf32, #tpu.memory_space<vmem>>, vector<8x384xf32>
    tpu.vector_store %arg11[%c40_163, %c0_164], %127 {strides = array<i32>} : memref<72x384xf32, #tpu.memory_space<vmem>>, vector<8x384xf32>,
    %c0_165 = arith.constant 0 : index
    %c151_166 = arith.constant 151 : index
    %129 = vector.load %arg10[%c0_165, %c151_166] : memref<8x640xf32, #tpu.memory_space<vmem>>, vector<8x384xf32>
    %c48_167 = arith.constant 48 : index
    %c0_168 = arith.constant 0 : index
    %130 = vector.load %arg11[%c48_167, %c0_168] : memref<72x384xf32, #tpu.memory_space<vmem>>, vector<8x384xf32>
    tpu.vector_store %arg11[%c48_167, %c0_168], %129 {strides = array<i32>} : memref<72x384xf32, #tpu.memory_space<vmem>>, vector<8x384xf32>,
    %c0_169 = arith.constant 0 : index
    %c152_170 = arith.constant 152 : index
    %131 = vector.load %arg10[%c0_169, %c152_170] : memref<8x640xf32, #tpu.memory_space<vmem>>, vector<8x384xf32>
    %c56_171 = arith.constant 56 : index
    %c0_172 = arith.constant 0 : index
    %132 = vector.load %arg11[%c56_171, %c0_172] : memref<72x384xf32, #tpu.memory_space<vmem>>, vector<8x384xf32>
    tpu.vector_store %arg11[%c56_171, %c0_172], %131 {strides = array<i32>} : memref<72x384xf32, #tpu.memory_space<vmem>>, vector<8x384xf32>,
    %c0_173 = arith.constant 0 : index
    %c153_174 = arith.constant 153 : index
    %133 = vector.load %arg10[%c0_173, %c153_174] : memref<8x640xf32, #tpu.memory_space<vmem>>, vector<8x384xf32>
    %c64_175 = arith.constant 64 : index
    %c0_176 = arith.constant 0 : index
    %134 = vector.load %arg11[%c64_175, %c0_176] : memref<72x384xf32, #tpu.memory_space<vmem>>, vector<8x384xf32>
    tpu.vector_store %arg11[%c64_175, %c0_176], %133 {strides = array<i32>} : memref<72x384xf32, #tpu.memory_space<vmem>>, vector<8x384xf32>,
    %c0_177 = arith.constant 0 : index
    %c0_178 = arith.constant 0 : index
    %135 = vector.load %arg7[%c0_177, %c0_178] : memref<4x72xf32, #tpu.memory_space<vmem>>, vector<4x72xf32>
    %c0_179 = arith.constant 0 : index
    %c0_180 = arith.constant 0 : index
    %136 = vector.load %arg11[%c0_179, %c0_180] : memref<72x384xf32, #tpu.memory_space<vmem>>, vector<72x384xf32>
    %cst_181 = arith.constant dense<0.000000e+00> : vector<4x384xf32>
    %137 = tpu.matmul %135, %136, %cst_181 {dimension_numbers = #tpu.dot_dimension_numbers<[1], [0], [0], [1], [0, 0, 1, 1], [], []>} : vector<4x72xf32>, vector<72x384xf32>, vector<4x384xf32> -> vector<4x384xf32>
    %c0_182 = arith.constant 0 : index
    %c0_183 = arith.constant 0 : index
    %138 = vector.load %arg8[%c0_182, %c0_183] : memref<4x1xf32, #tpu.memory_space<vmem>>, vector<4x1xf32>
    %139 = vector.broadcast %138 : vector<4x1xf32> to vector<4x384xf32>
    %140 = arith.addf %137, %139 : vector<4x384xf32>
    %cst_184 = arith.constant 0.000000e+00 : f32
    %141 = vector.broadcast %cst_184 : f32 to vector<4x384xf32>
    %142 = arith.maximumf %140, %141 : vector<4x384xf32>
    %c0_185 = arith.constant 0 : index
    %c0_186 = arith.constant 0 : index
    %c128_187 = arith.constant 128 : index
    %143 = vector.load %arg1[%c0_185, %c0_186, %c128_187] : memref<1x4x640xf32, #tpu.memory_space<vmem>>, vector<1x4x384xf32>
    %144 = vector.shape_cast %143 : vector<1x4x384xf32> to vector<4x384xf32>
    %145 = arith.addf %142, %144 : vector<4x384xf32>
    %c0_188 = arith.constant 0 : index
    %c0_189 = arith.constant 0 : index
    %c0_190 = arith.constant 0 : index
    %146 = vector.load %arg9[%c0_188, %c0_189, %c0_190] : memref<1x4x384xf32, #tpu.memory_space<vmem>>, vector<1x4x384xf32>
    %147 = vector.shape_cast %146 : vector<1x4x384xf32> to vector<4x384xf32>
    %148 = vector.shape_cast %145 : vector<4x384xf32> to vector<1x4x384xf32>
    tpu.vector_store %arg9[%c0_188, %c0_189, %c0_190], %148 {strides = array<i32>} : memref<1x4x384xf32, #tpu.memory_space<vmem>>, vector<1x4x384xf32>,
    return
  }
  func.func @transform_0(%arg0: i32) -> (i32, i32, i32) {
    %c0_i32 = arith.constant 0 : i32
    %c0_i32_0 = arith.constant 0 : i32
    %c0_i32_1 = arith.constant 0 : i32
    return %arg0, %c0_i32, %c0_i32_0 : i32, i32, i32
  }
  func.func @transform_1(%arg0: i32) -> (i32, i32) {
    %c0_i32 = arith.constant 0 : i32
    %c0_i32_0 = arith.constant 0 : i32
    %c0_i32_1 = arith.constant 0 : i32
    return %c0_i32, %c0_i32_0 : i32, i32
  }
  func.func @transform_2(%arg0: i32) -> (i32, i32) {
    %c0_i32 = arith.constant 0 : i32
    %c0_i32_0 = arith.constant 0 : i32
    %c0_i32_1 = arith.constant 0 : i32
    return %c0_i32, %c0_i32_0 : i32, i32
  }
  func.func @transform_3(%arg0: i32) -> (i32, i32) {
    %c0_i32 = arith.constant 0 : i32
    %c0_i32_0 = arith.constant 0 : i32
    %c0_i32_1 = arith.constant 0 : i32
    return %c0_i32, %c0_i32_0 : i32, i32
  }
  func.func @transform_4(%arg0: i32) -> (i32, i32) {
    %c0_i32 = arith.constant 0 : i32
    %c0_i32_0 = arith.constant 0 : i32
    %c0_i32_1 = arith.constant 0 : i32
    return %c0_i32, %c0_i32_0 : i32, i32
  }
  func.func @transform_5(%arg0: i32) -> (i32, i32) {
    %c0_i32 = arith.constant 0 : i32
    %c0_i32_0 = arith.constant 0 : i32
    %c0_i32_1 = arith.constant 0 : i32
    return %c0_i32, %c0_i32_0 : i32, i32
  }
  func.func @transform_6(%arg0: i32) -> (i32, i32) {
    %c0_i32 = arith.constant 0 : i32
    %c0_i32_0 = arith.constant 0 : i32
    %c0_i32_1 = arith.constant 0 : i32
    return %c0_i32, %c0_i32_0 : i32, i32
  }
  func.func @transform_7(%arg0: i32) -> (i32, i32) {
    %c0_i32 = arith.constant 0 : i32
    %c0_i32_0 = arith.constant 0 : i32
    %c0_i32_1 = arith.constant 0 : i32
    return %c0_i32, %c0_i32_0 : i32, i32
  }
  func.func @transform_8(%arg0: i32) -> (i32, i32, i32) {
    %c0_i32 = arith.constant 0 : i32
    %c0_i32_0 = arith.constant 0 : i32
    %c0_i32_1 = arith.constant 0 : i32
    return %arg0, %c0_i32, %c0_i32_0 : i32, i32, i32
  }
}

</mosaic_0001>

<llo_original>
// kernel: merge_run_nchw.1
$region0: #{merge_run_nchw.1}
  #allocation0 [shape = 'u32[]', space=smem, size = 0x4, offset = 0x4, fixed_abs, tag = 'smem constant byte address 0x4 - core index']
  #allocation1 [shape = 'u32[144,128]{1,0:T(1,128)}', space=vmem, size = 0x12000, scoped, tag = 'internal scratch']
  #allocation2 [shape = 'f32[8,640]{1,0:T(8,128)}', space=vmem, size = 0x5000, scoped, tag = 'scratch operand']
  #allocation3 [shape = 'f32[72,384]{1,0:T(8,128)}', space=vmem, size = 0x1b000, scoped, tag = 'scratch operand']
  %s0 = inlined_call_operand.vmem [shape: f32[2,4,640], index: 0, kind: input, shape index: {}]
  %s1 = inlined_call_operand.vmem [shape: f32[1,384], index: 1, kind: input, shape index: {}]
  %s2 = inlined_call_operand.vmem [shape: f32[8,72], index: 2, kind: input, shape index: {}]
  %s3 = inlined_call_operand.vmem [shape: f32[8,1], index: 3, kind: input, shape index: {}]
  %s4 = inlined_call_operand.vmem [shape: f32[8,72], index: 4, kind: input, shape index: {}]
  %s5 = inlined_call_operand.vmem [shape: f32[8,1], index: 5, kind: input, shape index: {}]
  %s6 = inlined_call_operand.vmem [shape: f32[4,72], index: 6, kind: input, shape index: {}]
  %s7 = inlined_call_operand.vmem [shape: f32[4,1], index: 7, kind: input, shape index: {}]
  %s8 = inlined_call_operand.vmem [shape: f32[2,4,384], index: 8, kind: output, shape index: {}]
  %s9 = sld [smem:[#allocation0]]
  $region65: #{merge_run_nchw.1} parent=0
    _
  %s11 = ssub.s32 1, %s9
  %s12 = scalar_select 0, %s11, %s9
  loop: start=0, step=1, limit=4
  $region2: #{merge_run_nchw.1} parent=0 // loop_pre_header
    _
  $region3: #{merge_run_nchw.1} parent=0 // loop_header
    %s14 = sphi 0, %s18
    %p15 = scmp.ge.s32.totalorder %s14, 4
    %s24 = sphi 0, %s26
    %s27 = sphi 0, %s24
    %s28 = sphi 0, %s27
    %s44 = sphi 0, %s28
    %s48 = sphi 0, %s48
    %s50 = sphi 0, %s48
    %s51 = sphi 0, %s50
    %s65 = sphi 0, %s51
    %s69 = sphi 0, %s69
    %s71 = sphi 0, %s69
    %s72 = sphi 0, %s71
    %s86 = sphi 0, %s72
    %s90 = sphi 0, %s90
    %s92 = sphi 0, %s90
    %s93 = sphi 0, %s92
    %s107 = sphi 0, %s93
    %s111 = sphi 0, %s111
    %s113 = sphi 0, %s111
    %s114 = sphi 0, %s113
    %s128 = sphi 0, %s114
    %s132 = sphi 0, %s132
    %s134 = sphi 0, %s132
    %s135 = sphi 0, %s134
    %s149 = sphi 0, %s135
    %s153 = sphi 0, %s153
    %s155 = sphi 0, %s153
    %s156 = sphi 0, %s155
    %s170 = sphi 0, %s156
    %s174 = sphi 0, %s174
    %s176 = sphi 0, %s174
    %s177 = sphi 0, %s176
    %s191 = sphi 0, %s177
    %s197 = sphi 0, %s199
    %s200 = sphi 0, %s197
    %s201 = sphi 0, %s200
    %s217 = sphi 0, %s201
  $region4: #{merge_run_nchw.1} parent=0 // loop_header_branch
    %17 = sbr.rel (%p15) target = $region8
  $region5: #{merge_run_nchw.1} parent=0 // loop_body
    %s19 = ssub.s32 %s14, 1
    %s20 = ssub.s32 %s14, 2
    %s21 = sadd.s32 %s14, 1
    %s22 = ssub.s32 %s14, %s21
    %p23 = scmp.eq.s32.totalorder %s22, 0
    %s25 = sadd.s32 %s24, 1
    %s26 = scalar_select %p23, %s24, %s25
    %p29 = pneg %p23
    %p30 = scmp.eq.s32.totalorder %s14, 1
    %p31 = por %p29, %p30
    %p32 = scmp.ne.s32.totalorder %s24, %s27
    %p33 = scmp.eq.s32.totalorder %s14, 0
    %p34 = por %p32, %p33
    %p35 = scmp.ne.s32.totalorder %s24, %s27
    %p36 = scmp.eq.s32.totalorder %s19, 1
    %p37 = por %p35, %p36
    %p38 = scmp.ne.s32.totalorder %s27, %s28
    %p39 = scmp.eq.s32.totalorder %s19, 0
    %p40 = por %p38, %p39
    %p41 = scmp.ne.s32.totalorder %s27, %s28
    %p42 = scmp.eq.s32.totalorder %s20, 1
    %p43 = por %p41, %p42
    %p45 = scmp.ne.s32.totalorder %s28, %s44
    %p46 = scmp.eq.s32.totalorder %s20, 0
    %p47 = por %p45, %p46
    %s49 = sadd.s32 %s48, 1
    %p52 = scmp.eq.s32.totalorder %s14, 1
    %p53 = scmp.ne.s32.totalorder %s48, %s50
    %p54 = scmp.eq.s32.totalorder %s14, 0
    %p55 = por %p53, %p54
    %p56 = scmp.ne.s32.totalorder %s48, %s50
    %p57 = scmp.eq.s32.totalorder %s19, 1
    %p58 = por %p56, %p57
    %p59 = scmp.ne.s32.totalorder %s50, %s51
    %p60 = scmp.eq.s32.totalorder %s19, 0
    %p61 = por %p59, %p60
    %p62 = scmp.ne.s32.totalorder %s50, %s51
    %p63 = scmp.eq.s32.totalorder %s20, 1
    %p64 = por %p62, %p63
    %p66 = scmp.ne.s32.totalorder %s51, %s65
    %p67 = scmp.eq.s32.totalorder %s20, 0
    %p68 = por %p66, %p67
    %s70 = sadd.s32 %s69, 1
    %p73 = scmp.eq.s32.totalorder %s14, 1
    %p74 = scmp.ne.s32.totalorder %s69, %s71
    %p75 = scmp.eq.s32.totalorder %s14, 0
    %p76 = por %p74, %p75
    %p77 = scmp.ne.s32.totalorder %s69, %s71
    %p78 = scmp.eq.s32.totalorder %s19, 1
    %p79 = por %p77, %p78
    %p80 = scmp.ne.s32.totalorder %s71, %s72
    %p81 = scmp.eq.s32.totalorder %s19, 0
    %p82 = por %p80, %p81
    %p83 = scmp.ne.s32.totalorder %s71, %s72
    %p84 = scmp.eq.s32.totalorder %s20, 1
    %p85 = por %p83, %p84
    %p87 = scmp.ne.s32.totalorder %s72, %s86
    %p88 = scmp.eq.s32.totalorder %s20, 0
    %p89 = por %p87, %p88
    %s91 = sadd.s32 %s90, 1
    %p94 = scmp.eq.s32.totalorder %s14, 1
    %p95 = scmp.ne.s32.totalorder %s90, %s92
    %p96 = scmp.eq.s32.totalorder %s14, 0
    %p97 = por %p95, %p96
    %p98 = scmp.ne.s32.totalorder %s90, %s92
    %p99 = scmp.eq.s32.totalorder %s19, 1
    %p100 = por %p98, %p99
    %p101 = scmp.ne.s32.totalorder %s92, %s93
    %p102 = scmp.eq.s32.totalorder %s19, 0
    %p103 = por %p101, %p102
    %p104 = scmp.ne.s32.totalorder %s92, %s93
    %p105 = scmp.eq.s32.totalorder %s20, 1
    %p106 = por %p104, %p105
    %p108 = scmp.ne.s32.totalorder %s93, %s107
    %p109 = scmp.eq.s32.totalorder %s20, 0
    %p110 = por %p108, %p109
    %s112 = sadd.s32 %s111, 1
    %p115 = scmp.eq.s32.totalorder %s14, 1
    %p116 = scmp.ne.s32.totalorder %s111, %s113
    %p117 = scmp.eq.s32.totalorder %s14, 0
    %p118 = por %p116, %p117
    %p119 = scmp.ne.s32.totalorder %s111, %s113
    %p120 = scmp.eq.s32.totalorder %s19, 1
    %p121 = por %p119, %p120
    %p122 = scmp.ne.s32.totalorder %s113, %s114
    %p123 = scmp.eq.s32.totalorder %s19, 0
    %p124 = por %p122, %p123
    %p125 = scmp.ne.s32.totalorder %s113, %s114
    %p126 = scmp.eq.s32.totalorder %s20, 1
    %p127 = por %p125, %p126
    %p129 = scmp.ne.s32.totalorder %s114, %s128
    %p130 = scmp.eq.s32.totalorder %s20, 0
    %p131 = por %p129, %p130
    %s133 = sadd.s32 %s132, 1
    %p136 = scmp.eq.s32.totalorder %s14, 1
    %p137 = scmp.ne.s32.totalorder %s132, %s134
    %p138 = scmp.eq.s32.totalorder %s14, 0
    %p139 = por %p137, %p138
    %p140 = scmp.ne.s32.totalorder %s132, %s134
    %p141 = scmp.eq.s32.totalorder %s19, 1
    %p142 = por %p140, %p141
    %p143 = scmp.ne.s32.totalorder %s134, %s135
    %p144 = scmp.eq.s32.totalorder %s19, 0
    %p145 = por %p143, %p144
    %p146 = scmp.ne.s32.totalorder %s134, %s135
    %p147 = scmp.eq.s32.totalorder %s20, 1
    %p148 = por %p146, %p147
    %p150 = scmp.ne.s32.totalorder %s135, %s149
    %p151 = scmp.eq.s32.totalorder %s20, 0
    %p152 = por %p150, %p151
    %s154 = sadd.s32 %s153, 1
    %p157 = scmp.eq.s32.totalorder %s14, 1
    %p158 = scmp.ne.s32.totalorder %s153, %s155
    %p159 = scmp.eq.s32.totalorder %s14, 0
    %p160 = por %p158, %p159
    %p161 = scmp.ne.s32.totalorder %s153, %s155
    %p162 = scmp.eq.s32.totalorder %s19, 1
    %p163 = por %p161, %p162
    %p164 = scmp.ne.s32.totalorder %s155, %s156
    %p165 = scmp.eq.s32.totalorder %s19, 0
    %p166 = por %p164, %p165
    %p167 = scmp.ne.s32.totalorder %s155, %s156
    %p168 = scmp.eq.s32.totalorder %s20, 1
    %p169 = por %p167, %p168
    %p171 = scmp.ne.s32.totalorder %s156, %s170
    %p172 = scmp.eq.s32.totalorder %s20, 0
    %p173 = por %p171, %p172
    %s175 = sadd.s32 %s174, 1
    %p178 = scmp.eq.s32.totalorder %s14, 1
    %p179 = scmp.ne.s32.totalorder %s174, %s176
    %p180 = scmp.eq.s32.totalorder %s14, 0
    %p181 = por %p179, %p180
    %p182 = scmp.ne.s32.totalorder %s174, %s176
    %p183 = scmp.eq.s32.totalorder %s19, 1
    %p184 = por %p182, %p183
    %p185 = scmp.ne.s32.totalorder %s176, %s177
    %p186 = scmp.eq.s32.totalorder %s19, 0
    %p187 = por %p185, %p186
    %p188 = scmp.ne.s32.totalorder %s176, %s177
    %p189 = scmp.eq.s32.totalorder %s20, 1
    %p190 = por %p188, %p189
    %p192 = scmp.ne.s32.totalorder %s177, %s191
    %p193 = scmp.eq.s32.totalorder %s20, 0
    %p194 = por %p192, %p193
    %s195 = ssub.s32 %s14, %s21
    %p196 = scmp.eq.s32.totalorder %s195, 0
    %s198 = sadd.s32 %s197, 1
    %s199 = scalar_select %p196, %s197, %s198
    %p202 = pneg %p196
    %p203 = scmp.eq.s32.totalorder %s14, 1
    %p204 = por %p202, %p203
    %p205 = scmp.ne.s32.totalorder %s197, %s200
    %p206 = scmp.eq.s32.totalorder %s14, 0
    %p207 = por %p205, %p206
    %p208 = scmp.ne.s32.totalorder %s197, %s200
    %p209 = scmp.eq.s32.totalorder %s19, 1
    %p210 = por %p208, %p209
    %p211 = scmp.ne.s32.totalorder %s200, %s201
    %p212 = scmp.eq.s32.totalorder %s19, 0
    %p213 = por %p211, %p212
    %p214 = scmp.ne.s32.totalorder %s200, %s201
    %p215 = scmp.eq.s32.totalorder %s20, 1
    %p216 = por %p214, %p215
    %p218 = scmp.ne.s32.totalorder %s201, %s217
    %p219 = scmp.eq.s32.totalorder %s20, 0
    %p220 = por %p218, %p219
    %p221 = scmp.le.s32.totalorder 1, %s14
    %p222 = scmp.lt.s32.totalorder %s14, 3
    %p223 = pnand %p221, %p222
    %p224 = pneg %p223
    // Predicated region
    $region9: #{merge_run_nchw.1} parent=5 // pred_check
      _
    $region10: #{merge_run_nchw.1} parent=5 // pred_check_branch
      %226 = sbr.rel (%p223) target = $region12
    $region11: #{merge_run_nchw.1} parent=5 // pred_region
      %s227 = ssub.s32 %s14, 1
      // Predicated region
      $region13: #{merge_run_nchw.1} parent=11 // pred_check
        %p228 = pneg %p61
      $region14: #{merge_run_nchw.1} parent=11 // pred_check_branch
        %230 = sbr.rel (%p228) target = $region16
      $region15: #{merge_run_nchw.1} parent=11 // pred_region
        _
      $region16: #{merge_run_nchw.1} parent=11 // pred_fallthru
        _
      // Predicated region
      $region17: #{merge_run_nchw.1} parent=11 // pred_check
        %p231 = pneg %p82
      $region18: #{merge_run_nchw.1} parent=11 // pred_check_branch
        %233 = sbr.rel (%p231) target = $region20
      $region19: #{merge_run_nchw.1} parent=11 // pred_region
        _
      $region20: #{merge_run_nchw.1} parent=11 // pred_fallthru
        _
      // Predicated region
      $region21: #{merge_run_nchw.1} parent=11 // pred_check
        %p234 = pneg %p103
      $region22: #{merge_run_nchw.1} parent=11 // pred_check_branch
        %236 = sbr.rel (%p234) target = $region24
      $region23: #{merge_run_nchw.1} parent=11 // pred_region
        _
      $region24: #{merge_run_nchw.1} parent=11 // pred_fallthru
        _
      // Predicated region
      $region25: #{merge_run_nchw.1} parent=11 // pred_check
        %p237 = pneg %p124
      $region26: #{merge_run_nchw.1} parent=11 // pred_check_branch
        %239 = sbr.rel (%p237) target = $region28
      $region27: #{merge_run_nchw.1} parent=11 // pred_region
        _
      $region28: #{merge_run_nchw.1} parent=11 // pred_fallthru
        _
      // Predicated region
      $region29: #{merge_run_nchw.1} parent=11 // pred_check
        %p240 = pneg %p145
      $region30: #{merge_run_nchw.1} parent=11 // pred_check_branch
        %242 = sbr.rel (%p240) target = $region32
      $region31: #{merge_run_nchw.1} parent=11 // pred_region
        _
      $region32: #{merge_run_nchw.1} parent=11 // pred_fallthru
        _
      // Predicated region
      $region33: #{merge_run_nchw.1} parent=11 // pred_check
        %p243 = pneg %p166
      $region34: #{merge_run_nchw.1} parent=11 // pred_check_branch
        %245 = sbr.rel (%p243) target = $region36
      $region35: #{merge_run_nchw.1} parent=11 // pred_region
        _
      $region36: #{merge_run_nchw.1} parent=11 // pred_fallthru
        _
      // Predicated region
      $region37: #{merge_run_nchw.1} parent=11 // pred_check
        %p246 = pneg %p187
      $region38: #{merge_run_nchw.1} parent=11 // pred_check_branch
        %248 = sbr.rel (%p246) target = $region40
      $region39: #{merge_run_nchw.1} parent=11 // pred_region
        _
      $region40: #{merge_run_nchw.1} parent=11 // pred_fallthru
        _
    $region12: #{merge_run_nchw.1} parent=5 // pred_fallthru
      _
    %p249 = scmp.lt.s32.totalorder %s14, 2
    // Predicated region
    $region41: #{merge_run_nchw.1} parent=5 // pred_check
      %p250 = pneg %p249
    $region42: #{merge_run_nchw.1} parent=5 // pred_check_branch
      %252 = sbr.rel (%p250) target = $region44
    $region43: #{merge_run_nchw.1} parent=5 // pred_region
      // Predicated region
      $region45: #{merge_run_nchw.1} parent=43 // pred_check
        %p253 = pneg %p34
      $region46: #{merge_run_nchw.1} parent=43 // pred_check_branch
        %255 = sbr.rel (%p253) target = $region48
      $region47: #{merge_run_nchw.1} parent=43 // pred_region
        %p256 = scmp.lt.s32.totalorder %s14, 1
        %s257 = scalar_select %p256, %s14, 1
        %s258 = smul.addr %s257, 5
        %s259 = smul.addr %s258, 4
        %s260 = scalar_lea.vmem %s0, %s259
      $region48: #{merge_run_nchw.1} parent=43 // pred_fallthru
        _
    $region44: #{merge_run_nchw.1} parent=5 // pred_fallthru
      _
    %p261 = scmp.le.s32.totalorder 1, %s14
    %p262 = scmp.lt.s32.totalorder %s14, 3
    %p263 = pnand %p261, %p262
    %p264 = pneg %p263
    // Predicated region
    $region49: #{merge_run_nchw.1} parent=5 // pred_check
      _
    $region50: #{merge_run_nchw.1} parent=5 // pred_check_branch
      %266 = sbr.rel (%p263) target = $region52
    $region51: #{merge_run_nchw.1} parent=5 // pred_region
      %s267 = ssub.s32 %s14, 1
      %p268 = scmp.lt.s32.totalorder %s19, 1
      %s269 = scalar_select %p268, %s19, 1
      %s270 = smul.addr %s269, 5
      %s271 = smul.addr %s270, 4
      %s272 = scalar_lea.vmem %s0, %s271
      %p273 = pneg %p40
      %p274 = pneg %p37
      %p275 = pneg %p61
      %p276 = pneg %p58
      %p277 = pneg %p82
      %p278 = pneg %p79
      %p279 = pneg %p103
      %p280 = pneg %p100
      %p281 = pneg %p124
      %p282 = pneg %p121
      %p283 = pneg %p145
      %p284 = pneg %p142
      %p285 = pneg %p166
      %p286 = pneg %p163
      %p287 = pneg %p187
      %p288 = pneg %p184
      %p289 = pneg %p213
      %p290 = pneg %p210
      %p291 = scmp.lt.s32.totalorder %s19, 1
      %s292 = scalar_select %p291, %s19, 1
      %s293 = smul.addr %s292, 3
      %s294 = smul.addr %s293, 4
      %s295 = scalar_lea.vmem %s8, %s294
      %p296 = scmp.lt.s32.totalorder %s19, 1
      %s297 = scalar_select %p296, %s19, 1
      %s298 = smul.addr %s297, 5
      %s299 = smul.addr %s298, 4
      %s300 = scalar_lea.vmem %s0, %s299
      %p301 = scmp.lt.s32.totalorder %s19, 1
      %s302 = scalar_select %p301, %s19, 1
      %s303 = smul.addr %s302, 3
      %s304 = smul.addr %s303, 4
      %s305 = scalar_lea.vmem %s8, %s304
      %306 = vst [vmem:[#allocation2] sm:$0xff] 0.0
      %307 = vst [vmem:[#allocation2 + $0x20] sm:$0xff] 0.0
      %v308 = vld [vmem:[%s1] sm:$0x7]
      %v310 = vlaneseq
      %v311 = vshrl.u32 %v310, 7
      %v312 = vsub.s32 0, %v311
      %v313 = vrot.slane %v308, %v312
      %v314 = vlaneseq
      %v315 = vshrl.u32 %v314, 7
      %v316 = vsub.s32 1, %v315
      %v317 = vrot.slane %v308, %v316
      %v318 = vlaneseq
      %v319 = vshrl.u32 %v318, 7
      %v320 = vsub.s32 2, %v319
      %v321 = vrot.slane %v308, %v320
      %v325 = vld [vmem:[%s300] sm:$0xff]
      %v326 = vld [vmem:[%s300 + $0x8] sm:$0xff]
      %v329 = vcombine.high %v325, %v325
      %v330 = vcombine.high %v326, %v326
      %331 = vrot.lane.b32.xlu0 %v325, 25
      %v332 = vpop.permute.xlu0 %331
      %333 = vrot.lane.b32.xlu0 %v329, 25
      %v334 = vpop.permute.xlu0 %333
      %335 = vrot.lane.b32.xlu0 %v326, 25
      %v336 = vpop.permute.xlu0 %335
      %337 = vrot.lane.b32.xlu0 %v330, 25
      %v338 = vpop.permute.xlu0 %337
      %vm339 = vcmask 203776
      %v340 = vsel %vm339, %v332, %v334
      %v341 = vsel %vm339, %v334, %v336
      %v342 = vsel %vm339, %v336, %v338
      %346 = vst [vmem:[#allocation3] sm:$0xf] %v340
      %347 = vst [vmem:[#allocation3 + $0x8] sm:$0xf] %v341
      %348 = vst [vmem:[#allocation3 + $0x10] sm:$0xf] %v342
      %v349 = vld [vmem:[%s300] sm:$0xff]
      %v350 = vld [vmem:[%s300 + $0x8] sm:$0xff]
      %v353 = vcombine.low %v349, %v349
      %v354 = vcombine.low %v350, %v350
      %355 = vrot.lane.b32.xlu0 %v353, 24
      %v356 = vpop.permute.xlu0 %355
      %357 = vrot.lane.b32.xlu0 %v349, 24
      %v358 = vpop.permute.xlu0 %357
      %359 = vrot.lane.b32.xlu0 %v354, 24
      %v360 = vpop.permute.xlu0 %359
      %361 = vrot.lane.b32.xlu0 %v350, 24
      %v362 = vpop.permute.xlu0 %361
      %vm363 = vcmask 195584
      %v364 = vsel %vm363, %v356, %v358
      %v365 = vsel %vm363, %v358, %v360
      %v366 = vsel %vm363, %v360, %v362
      %370 = vst [vmem:[#allocation3] sm:$0xf0] %v364
      %371 = vst [vmem:[#allocation3 + $0x8] sm:$0xf0] %v365
      %372 = vst [vmem:[#allocation3 + $0x10] sm:$0xf0] %v366
      %v373 = vld [vmem:[%s300] sm:$0xff]
      %v374 = vld [vmem:[%s300 + $0x8] sm:$0xff]
      %v377 = vcombine.high %v373, %v373
      %v378 = vcombine.high %v374, %v374
      %379 = vrot.lane.b32.xlu0 %v373, 23
      %v380 = vpop.permute.xlu0 %379
      %381 = vrot.lane.b32.xlu0 %v377, 23
      %v382 = vpop.permute.xlu0 %381
      %383 = vrot.lane.b32.xlu0 %v374, 23
      %v384 = vpop.permute.xlu0 %383
      %385 = vrot.lane.b32.xlu0 %v378, 23
      %v386 = vpop.permute.xlu0 %385
      %vm387 = vcmask 187392
      %v388 = vsel %vm387, %v380, %v382
      %v389 = vsel %vm387, %v382, %v384
      %v390 = vsel %vm387, %v384, %v386
      %394 = vst [vmem:[#allocation3 + $0x18] sm:$0xf] %v388
      %395 = vst [vmem:[#allocation3 + $0x20] sm:$0xf] %v389
      %396 = vst [vmem:[#allocation3 + $0x28] sm:$0xf] %v390
      %v397 = vld [vmem:[%s300] sm:$0xff]
      %v398 = vld [vmem:[%s300 + $0x8] sm:$0xff]
      %v401 = vcombine.low %v397, %v397
      %v402 = vcombine.low %v398, %v398
      %403 = vrot.lane.b32.xlu0 %v401, 1
      %v404 = vpop.permute.xlu0 %403
      %405 = vrot.lane.b32.xlu0 %v397, 1
      %v406 = vpop.permute.xlu0 %405
      %407 = vrot.lane.b32.xlu0 %v402, 1
      %v408 = vpop.permute.xlu0 %407
      %409 = vrot.lane.b32.xlu0 %v398, 1
      %v410 = vpop.permute.xlu0 %409
      %vm411 = vcmask 7168
      %v412 = vsel %vm411, %v404, %v406
      %v413 = vsel %vm411, %v406, %v408
      %v414 = vsel %vm411, %v408, %v410
      %418 = vst [vmem:[#allocation3 + $0x18] sm:$0xf0] %v412
      %419 = vst [vmem:[#allocation3 + $0x20] sm:$0xf0] %v413
      %420 = vst [vmem:[#allocation3 + $0x28] sm:$0xf0] %v414
      %v421 = vld [vmem:[%s300 + $0x4] sm:$0xff]
      %v422 = vld [vmem:[%s300 + $0xc] sm:$0xf]
      %v424 = vcombine.high %v421, %v421
      %426 = vst [vmem:[#allocation3 + $0x30] sm:$0xf] %v421
      %427 = vst [vmem:[#allocation3 + $0x38] sm:$0xf] %v424
      %428 = vst [vmem:[#allocation3 + $0x40] sm:$0xf] %v422
      %v429 = vld [vmem:[%s300 + $0x4] sm:$0xff]
      %v430 = vld [vmem:[%s300 + $0xc] sm:$0xff]
      %v433 = vcombine.low %v429, %v429
      %v434 = vcombine.low %v430, %v430
      %435 = vrot.lane.b32.xlu0 %v433, 127
      %v436 = vpop.permute.xlu0 %435
      %437 = vrot.lane.b32.xlu0 %v429, 127
      %v438 = vpop.permute.xlu0 %437
      %439 = vrot.lane.b32.xlu0 %v434, 127
      %v440 = vpop.permute.xlu0 %439
      %441 = vrot.lane.b32.xlu0 %v430, 127
      %v442 = vpop.permute.xlu0 %441
      %vm443 = vcmask 1039360
      %v444 = vsel %vm443, %v436, %v438
      %v445 = vsel %vm443, %v438, %v440
      %v446 = vsel %vm443, %v440, %v442
      %450 = vst [vmem:[#allocation3 + $0x30] sm:$0xf0] %v444
      %451 = vst [vmem:[#allocation3 + $0x38] sm:$0xf0] %v445
      %452 = vst [vmem:[#allocation3 + $0x40] sm:$0xf0] %v446
      %v453 = vld [vmem:[%s300 + $0x4] sm:$0xff]
      %v454 = vld [vmem:[%s300 + $0xc] sm:$0xff]
      %v457 = vcombine.high %v453, %v453
      %v458 = vcombine.high %v454, %v454
      %459 = vrot.lane.b32.xlu0 %v453, 105
      %v460 = vpop.permute.xlu0 %459
      %461 = vrot.lane.b32.xlu0 %v457, 105
      %v462 = vpop.permute.xlu0 %461
      %463 = vrot.lane.b32.xlu0 %v454, 105
      %v464 = vpop.permute.xlu0 %463
      %465 = vrot.lane.b32.xlu0 %v458, 105
      %v466 = vpop.permute.xlu0 %465
      %vm467 = vcmask 859136
      %v468 = vsel %vm467, %v460, %v462
      %v469 = vsel %vm467, %v462, %v464
      %v470 = vsel %vm467, %v464, %v466
      %474 = vst [vmem:[#allocation3 + $0x48] sm:$0xf] %v468
      %475 = vst [vmem:[#allocation3 + $0x50] sm:$0xf] %v469
      %476 = vst [vmem:[#allocation3 + $0x58] sm:$0xf] %v470
      %v477 = vld [vmem:[%s300 + $0x4] sm:$0xff]
      %v478 = vld [vmem:[%s300 + $0xc] sm:$0xff]
      %v481 = vcombine.low %v477, %v477
      %v482 = vcombine.low %v478, %v478
      %483 = vrot.lane.b32.xlu0 %v481, 104
      %v484 = vpop.permute.xlu0 %483
      %485 = vrot.lane.b32.xlu0 %v477, 104
      %v486 = vpop.permute.xlu0 %485
      %487 = vrot.lane.b32.xlu0 %v482, 104
      %v488 = vpop.permute.xlu0 %487
      %489 = vrot.lane.b32.xlu0 %v478, 104
      %v490 = vpop.permute.xlu0 %489
      %vm491 = vcmask 850944
      %v492 = vsel %vm491, %v484, %v486
      %v493 = vsel %vm491, %v486, %v488
      %v494 = vsel %vm491, %v488, %v490
      %498 = vst [vmem:[#allocation3 + $0x48] sm:$0xf0] %v492
      %499 = vst [vmem:[#allocation3 + $0x50] sm:$0xf0] %v493
      %500 = vst [vmem:[#allocation3 + $0x58] sm:$0xf0] %v494
      %v501 = vld [vmem:[%s300 + $0x4] sm:$0xff]
      %v502 = vld [vmem:[%s300 + $0xc] sm:$0xff]
      %v505 = vcombine.high %v501, %v501
      %v506 = vcombine.high %v502, %v502
      %507 = vrot.lane.b32.xlu0 %v501, 103
      %v508 = vpop.permute.xlu0 %507
      %509 = vrot.lane.b32.xlu0 %v505, 103
      %v510 = vpop.permute.xlu0 %509
      %511 = vrot.lane.b32.xlu0 %v502, 103
      %v512 = vpop.permute.xlu0 %511
      %513 = vrot.lane.b32.xlu0 %v506, 103
      %v514 = vpop.permute.xlu0 %513
      %vm515 = vcmask 842752
      %v516 = vsel %vm515, %v508, %v510
      %v517 = vsel %vm515, %v510, %v512
      %v518 = vsel %vm515, %v512, %v514
      %522 = vst [vmem:[#allocation3 + $0x60] sm:$0xf] %v516
      %523 = vst [vmem:[#allocation3 + $0x68] sm:$0xf] %v517
      %524 = vst [vmem:[#allocation3 + $0x70] sm:$0xf] %v518
      %v525 = vld [vmem:[%s300] sm:$0xff]
      %v526 = vld [vmem:[%s300 + $0x8] sm:$0xff]
      %v529 = vcombine.low %v525, %v525
      %v530 = vcombine.low %v526, %v526
      %531 = vrot.lane.b32.xlu0 %v529, 75
      %v532 = vpop.permute.xlu0 %531
      %533 = vrot.lane.b32.xlu0 %v525, 75
      %v534 = vpop.permute.xlu0 %533
      %535 = vrot.lane.b32.xlu0 %v530, 75
      %v536 = vpop.permute.xlu0 %535
      %537 = vrot.lane.b32.xlu0 %v526, 75
      %v538 = vpop.permute.xlu0 %537
      %vm539 = vcmask 613376
      %v540 = vsel %vm539, %v532, %v534
      %v541 = vsel %vm539, %v534, %v536
      %v542 = vsel %vm539, %v536, %v538
      %546 = vst [vmem:[#allocation3 + $0x60] sm:$0xf0] %v540
      %547 = vst [vmem:[#allocation3 + $0x68] sm:$0xf0] %v541
      %548 = vst [vmem:[#allocation3 + $0x70] sm:$0xf0] %v542
      %v549 = vld [vmem:[%s300] sm:$0xff]
      %v550 = vld [vmem:[%s300 + $0x8] sm:$0xff]
      %v553 = vcombine.high %v549, %v549
      %v554 = vcombine.high %v550, %v550
      %555 = vrot.lane.b32.xlu0 %v549, 72
      %v556 = vpop.permute.xlu0 %555
      %557 = vrot.lane.b32.xlu0 %v553, 72
      %v558 = vpop.permute.xlu0 %557
      %559 = vrot.lane.b32.xlu0 %v550, 72
      %v560 = vpop.permute.xlu0 %559
      %561 = vrot.lane.b32.xlu0 %v554, 72
      %v562 = vpop.permute.xlu0 %561
      %vm563 = vcmask 588800
      %v564 = vsel %vm563, %v556, %v558
      %v565 = vsel %vm563, %v558, %v560
      %v566 = vsel %vm563, %v560, %v562
      %570 = vst [vmem:[#allocation3 + $0x78] sm:$0xf] %v564
      %571 = vst [vmem:[#allocation3 + $0x80] sm:$0xf] %v565
      %572 = vst [vmem:[#allocation3 + $0x88] sm:$0xf] %v566
      %v573 = vld [vmem:[%s300] sm:$0xff]
      %v574 = vld [vmem:[%s300 + $0x8] sm:$0xff]
      %v577 = vcombine.low %v573, %v573
      %v578 = vcombine.low %v574, %v574
      %579 = vrot.lane.b32.xlu0 %v577, 69
      %v580 = vpop.permute.xlu0 %579
      %581 = vrot.lane.b32.xlu0 %v573, 69
      %v582 = vpop.permute.xlu0 %581
      %583 = vrot.lane.b32.xlu0 %v578, 69
      %v584 = vpop.permute.xlu0 %583
      %585 = vrot.lane.b32.xlu0 %v574, 69
      %v586 = vpop.permute.xlu0 %585
      %vm587 = vcmask 564224
      %v588 = vsel %vm587, %v580, %v582
      %v589 = vsel %vm587, %v582, %v584
      %v590 = vsel %vm587, %v584, %v586
      %594 = vst [vmem:[#allocation3 + $0x78] sm:$0xf0] %v588
      %595 = vst [vmem:[#allocation3 + $0x80] sm:$0xf0] %v589
      %596 = vst [vmem:[#allocation3 + $0x88] sm:$0xf0] %v590
      %v597 = vld [vmem:[%s300] sm:$0xff]
      %v598 = vld [vmem:[%s300 + $0x8] sm:$0xff]
      %v601 = vcombine.high %v597, %v597
      %v602 = vcombine.high %v598, %v598
      %603 = vrot.lane.b32.xlu0 %v597, 3
      %v604 = vpop.permute.xlu0 %603
      %605 = vrot.lane.b32.xlu0 %v601, 3
      %v606 = vpop.permute.xlu0 %605
      %607 = vrot.lane.b32.xlu0 %v598, 3
      %v608 = vpop.permute.xlu0 %607
      %609 = vrot.lane.b32.xlu0 %v602, 3
      %v610 = vpop.permute.xlu0 %609
      %vm611 = vcmask 23552
      %v612 = vsel %vm611, %v604, %v606
      %v613 = vsel %vm611, %v606, %v608
      %v614 = vsel %vm611, %v608, %v610
      %618 = vst [vmem:[#allocation3 + $0x90] sm:$0xf] %v612
      %619 = vst [vmem:[#allocation3 + $0x98] sm:$0xf] %v613
      %620 = vst [vmem:[#allocation3 + $0xa0] sm:$0xf] %v614
      %v621 = vld [vmem:[%s300 + $0x4] sm:$0xff]
      %v622 = vld [vmem:[%s300 + $0xc] sm:$0xf]
      %v625 = vcombine.low %v621, %v621
      %v626 = vcombine.low %v622, %v622
      %629 = vst [vmem:[#allocation3 + $0x90] sm:$0xf0] %v625
      %630 = vst [vmem:[#allocation3 + $0x98] sm:$0xf0] %v621
      %631 = vst [vmem:[#allocation3 + $0xa0] sm:$0xf0] %v626
      %v632 = vld [vmem:[%s300 + $0x4] sm:$0xff]
      %v633 = vld [vmem:[%s300 + $0xc] sm:$0xff]
      %v636 = vcombine.high %v632, %v632
      %v637 = vcombine.high %v633, %v633
      %638 = vrot.lane.b32.xlu0 %v632, 125
      %v639 = vpop.permute.xlu0 %638
      %640 = vrot.lane.b32.xlu0 %v636, 125
      %v641 = vpop.permute.xlu0 %640
      %642 = vrot.lane.b32.xlu0 %v633, 125
      %v643 = vpop.permute.xlu0 %642
      %644 = vrot.lane.b32.xlu0 %v637, 125
      %v645 = vpop.permute.xlu0 %644
      %vm646 = vcmask 1022976
      %v647 = vsel %vm646, %v639, %v641
      %v648 = vsel %vm646, %v641, %v643
      %v649 = vsel %vm646, %v643, %v645
      %653 = vst [vmem:[#allocation3 + $0xa8] sm:$0xf] %v647
      %654 = vst [vmem:[#allocation3 + $0xb0] sm:$0xf] %v648
      %655 = vst [vmem:[#allocation3 + $0xb8] sm:$0xf] %v649
      %v656 = vld [vmem:[%s300 + $0x4] sm:$0xff]
      %v657 = vld [vmem:[%s300 + $0xc] sm:$0xff]
      %v660 = vcombine.low %v656, %v656
      %v661 = vcombine.low %v657, %v657
      %662 = vrot.lane.b32.xlu0 %v660, 59
      %v663 = vpop.permute.xlu0 %662
      %664 = vrot.lane.b32.xlu0 %v656, 59
      %v665 = vpop.permute.xlu0 %664
      %666 = vrot.lane.b32.xlu0 %v661, 59
      %v667 = vpop.permute.xlu0 %666
      %668 = vrot.lane.b32.xlu0 %v657, 59
      %v669 = vpop.permute.xlu0 %668
      %vm670 = vcmask 482304
      %v671 = vsel %vm670, %v663, %v665
      %v672 = vsel %vm670, %v665, %v667
      %v673 = vsel %vm670, %v667, %v669
      %677 = vst [vmem:[#allocation3 + $0xa8] sm:$0xf0] %v671
      %678 = vst [vmem:[#allocation3 + $0xb0] sm:$0xf0] %v672
      %679 = vst [vmem:[#allocation3 + $0xb8] sm:$0xf0] %v673
      %v680 = vld [vmem:[%s300 + $0x4] sm:$0xff]
      %v681 = vld [vmem:[%s300 + $0xc] sm:$0xff]
      %v684 = vcombine.high %v680, %v680
      %v685 = vcombine.high %v681, %v681
      %686 = vrot.lane.b32.xlu0 %v680, 56
      %v687 = vpop.permute.xlu0 %686
      %688 = vrot.lane.b32.xlu0 %v684, 56
      %v689 = vpop.permute.xlu0 %688
      %690 = vrot.lane.b32.xlu0 %v681, 56
      %v691 = vpop.permute.xlu0 %690
      %692 = vrot.lane.b32.xlu0 %v685, 56
      %v693 = vpop.permute.xlu0 %692
      %vm694 = vcmask 457728
      %v695 = vsel %vm694, %v687, %v689
      %v696 = vsel %vm694, %v689, %v691
      %v697 = vsel %vm694, %v691, %v693
      %701 = vst [vmem:[#allocation3 + $0xc0] sm:$0xf] %v695
      %702 = vst [vmem:[#allocation3 + $0xc8] sm:$0xf] %v696
      %703 = vst [vmem:[#allocation3 + $0xd0] sm:$0xf] %v697
      %v704 = vld [vmem:[%s300 + $0x4] sm:$0xff]
      %v705 = vld [vmem:[%s300 + $0xc] sm:$0xff]
      %v708 = vcombine.low %v704, %v704
      %v709 = vcombine.low %v705, %v705
      %710 = vrot.lane.b32.xlu0 %v708, 53
      %v711 = vpop.permute.xlu0 %710
      %712 = vrot.lane.b32.xlu0 %v704, 53
      %v713 = vpop.permute.xlu0 %712
      %714 = vrot.lane.b32.xlu0 %v709, 53
      %v715 = vpop.permute.xlu0 %714
      %716 = vrot.lane.b32.xlu0 %v705, 53
      %v717 = vpop.permute.xlu0 %716
      %vm718 = vcmask 433152
      %v719 = vsel %vm718, %v711, %v713
      %v720 = vsel %vm718, %v713, %v715
      %v721 = vsel %vm718, %v715, %v717
      %725 = vst [vmem:[#allocation3 + $0xc0] sm:$0xf0] %v719
      %726 = vst [vmem:[#allocation3 + $0xc8] sm:$0xf0] %v720
      %727 = vst [vmem:[#allocation3 + $0xd0] sm:$0xf0] %v721
      %v728 = vld [vmem:[%s2] sm:$0xff]
      %v729 = vld [vmem:[#allocation3] sm:$0xff]
      %v730 = vld [vmem:[#allocation3 + $0x8] sm:$0xff]
      %v731 = vld [vmem:[#allocation3 + $0x10] sm:$0xff]
      %v732 = vld [vmem:[#allocation3 + $0x18] sm:$0xff]
      %v733 = vld [vmem:[#allocation3 + $0x20] sm:$0xff]
      %v734 = vld [vmem:[#allocation3 + $0x28] sm:$0xff]
      %v735 = vld [vmem:[#allocation3 + $0x30] sm:$0xff]
      %v736 = vld [vmem:[#allocation3 + $0x38] sm:$0xff]
      %v737 = vld [vmem:[#allocation3 + $0x40] sm:$0xff]
      %v738 = vld [vmem:[#allocation3 + $0x48] sm:$0xff]
      %v739 = vld [vmem:[#allocation3 + $0x50] sm:$0xff]
      %v740 = vld [vmem:[#allocation3 + $0x58] sm:$0xff]
      %v741 = vld [vmem:[#allocation3 + $0x60] sm:$0xff]
      %v742 = vld [vmem:[#allocation3 + $0x68] sm:$0xff]
      %v743 = vld [vmem:[#allocation3 + $0x70] sm:$0xff]
      %v744 = vld [vmem:[#allocation3 + $0x78] sm:$0xff]
      %v745 = vld [vmem:[#allocation3 + $0x80] sm:$0xff]
      %v746 = vld [vmem:[#allocation3 + $0x88] sm:$0xff]
      %v747 = vld [vmem:[#allocation3 + $0x90] sm:$0xff]
      %v748 = vld [vmem:[#allocation3 + $0x98] sm:$0xff]
      %v749 = vld [vmem:[#allocation3 + $0xa0] sm:$0xff]
      %v750 = vld [vmem:[#allocation3 + $0xa8] sm:$0xff]
      %v751 = vld [vmem:[#allocation3 + $0xb0] sm:$0xff]
      %v752 = vld [vmem:[#allocation3 + $0xb8] sm:$0xff]
      %v753 = vld [vmem:[#allocation3 + $0xc0] sm:$0xff]
      %v754 = vld [vmem:[#allocation3 + $0xc8] sm:$0xff]
      %v755 = vld [vmem:[#allocation3 + $0xd0] sm:$0xff]
      %v756 = vld [vmem:[%s3] sm:$0xff]
      %758 = vset.pattern.permute.xlu0 0
      %759 = vperm.xlu0 %758, %v756
      %v760 = vpop.permute.xlu0 %759
      %v763 = vsel %vm563, %v728, 0
      %765 = vmatprep.subr.mxu0 %v730
      %766 = vmatpush1.msra.mxu0 %v729
      %767 = vmatprep.subr.mxu0 %v733
      %768 = vmatpush1.msra.mxu0 %v732
      %769 = vmatprep.subr.mxu0 %v736
      %770 = vmatpush1.msra.mxu0 %v735
      %771 = vmatprep.subr.mxu0 %v739
      %772 = vmatpush1.msra.mxu0 %v738
      %773 = vmatprep.subr.mxu0 %v742
      %774 = vmatpush1.msra.mxu0 %v741
      %775 = vmatprep.subr.mxu0 %v745
      %776 = vmatpush1.msra.mxu0 %v744
      %777 = vmatprep.subr.mxu0 %v748
      %778 = vmatpush1.msra.mxu0 %v747
      %779 = vmatprep.subr.mxu0 %v751
      %780 = vmatpush1.msra.mxu0 %v750
      %781 = vmatprep.subr.mxu0 %v754
      %782 = vmatpush1.msra.mxu0 %v753
      %783 = vmatprep.subr.mxu0 0.0
      %784 = vmatpush1.msra.mxu0 0.0
      %785 = vmatprep.subr.mxu0 0.0
      %786 = vmatpush1.msra.mxu0 0.0
      %787 = vmatprep.subr.mxu0 0.0
      %788 = vmatpush1.msra.mxu0 0.0
      %789 = vmatprep.subr.mxu0 0.0
      %790 = vmatpush1.msra.mxu0 0.0
      %791 = vmatprep.subr.mxu0 0.0
      %792 = vmatpush1.msra.mxu0 0.0
      %793 = vmatprep.subr.mxu0 0.0
      %794 = vmatpush1.msra.mxu0 0.0
      %795 = vmatprep.subr.mxu0 0.0
      %796 = vmatpush1.msra.mxu0 0.0
      %797 = vmatprep.subr.mxu0 0.0
      %798 = vmatpush1.msra.mxu0 0.0
      %799 = vmatprep.subr.mxu0 0.0
      %800 = vmatpush1.msra.mxu0 0.0
      %801 = vmatprep.subr.mxu0 0.0
      %802 = vmatpush1.msra.mxu0 0.0
      %803 = vmatprep.subr.mxu0 0.0
      %804 = vmatpush1.msra.mxu0 0.0
      %805 = vmatprep.subr.mxu0 0.0
      %806 = vmatpush1.msra.mxu0 0.0
      %807 = vmatprep.subr.mxu0 0.0
      %808 = vmatpush1.msra.mxu0 0.0
      %809 = vmatprep.subr.mxu0 0.0
      %810 = vmatpush1.msra.mxu0 0.0
      %811 = vmatprep.subr.mxu0 0.0
      %812 = vmatpush1.msra.mxu0 0.0
      %813 = vmatprep.subr.mxu0 0.0
      %814 = vmatpush1.msra.mxu0 0.0
      %815 = vmatprep.subr.mxu0 0.0
      %816 = vmatpush1.msra.mxu0 0.0
      %817 = vmatprep.subr.mxu0 0.0
      %818 = vmatpush1.msra.mxu0 0.0
      %819 = vmatprep.subr.mxu0 0.0
      %820 = vmatpush1.msra.mxu0 0.0
      %821 = vmatprep.subr.mxu0 0.0
      %822 = vmatpush1.msra.mxu0 0.0
      %823 = vmatprep.subr.mxu0 0.0
      %824 = vmatpush1.msra.mxu0 0.0
      %825 = vmatprep.subr.mxu0 0.0
      %826 = vmatpush1.msra.mxu0 0.0
      %827 = vmatprep.subr.mxu0 0.0
      %828 = vmatpush1.msra.mxu0 0.0
      %829 = vmatprep.mubr.f32.mxu0 0.0
      %830 = vmatmul.mubr.f32.gmra.mrb[0].mxu0 %v763
      %v831 = vpop.f32.mrb[0].mxu0
      %v832 = vadd.f32 %v760, %v831
      %v833 = vpop.f32.mrb[0].mxu0
      %v834 = vadd.f32 %v760, %v833
      %835 = vdwg.mxu0
      %836 = vmatprep.subr.mxu0 0.0
      %837 = vmatpush1.msra.mxu0 %v731
      %838 = vmatprep.subr.mxu0 0.0
      %839 = vmatpush1.msra.mxu0 %v734
      %840 = vmatprep.subr.mxu0 0.0
      %841 = vmatpush1.msra.mxu0 %v737
      %842 = vmatprep.subr.mxu0 0.0
      %843 = vmatpush1.msra.mxu0 %v740
      %844 = vmatprep.subr.mxu0 0.0
      %845 = vmatpush1.msra.mxu0 %v743
      %846 = vmatprep.subr.mxu0 0.0
      %847 = vmatpush1.msra.mxu0 %v746
      %848 = vmatprep.subr.mxu0 0.0
      %849 = vmatpush1.msra.mxu0 %v749
      %850 = vmatprep.subr.mxu0 0.0
      %851 = vmatpush1.msra.mxu0 %v752
      %852 = vmatprep.subr.mxu0 0.0
      %853 = vmatpush1.msra.mxu0 %v755
      %854 = vmatprep.subr.mxu0 0.0
      %855 = vmatpush1.msra.mxu0 0.0
      %856 = vmatprep.subr.mxu0 0.0
      %857 = vmatpush1.msra.mxu0 0.0
      %858 = vmatprep.subr.mxu0 0.0
      %859 = vmatpush1.msra.mxu0 0.0
      %860 = vmatprep.subr.mxu0 0.0
      %861 = vmatpush1.msra.mxu0 0.0
      %862 = vmatprep.subr.mxu0 0.0
      %863 = vmatpush1.msra.mxu0 0.0
      %864 = vmatprep.subr.mxu0 0.0
      %865 = vmatpush1.msra.mxu0 0.0
      %866 = vmatprep.subr.mxu0 0.0
      %867 = vmatpush1.msra.mxu0 0.0
      %868 = vmatprep.subr.mxu0 0.0
      %869 = vmatpush1.msra.mxu0 0.0
      %870 = vmatprep.subr.mxu0 0.0
      %871 = vmatpush1.msra.mxu0 0.0
      %872 = vmatprep.subr.mxu0 0.0
      %873 = vmatpush1.msra.mxu0 0.0
      %874 = vmatprep.subr.mxu0 0.0
      %875 = vmatpush1.msra.mxu0 0.0
      %876 = vmatprep.subr.mxu0 0.0
      %877 = vmatpush1.msra.mxu0 0.0
      %878 = vmatprep.subr.mxu0 0.0
      %879 = vmatpush1.msra.mxu0 0.0
      %880 = vmatprep.subr.mxu0 0.0
      %881 = vmatpush1.msra.mxu0 0.0
      %882 = vmatprep.subr.mxu0 0.0
      %883 = vmatpush1.msra.mxu0 0.0
      %884 = vmatprep.subr.mxu0 0.0
      %885 = vmatpush1.msra.mxu0 0.0
      %886 = vmatprep.subr.mxu0 0.0
      %887 = vmatpush1.msra.mxu0 0.0
      %888 = vmatprep.subr.mxu0 0.0
      %889 = vmatpush1.msra.mxu0 0.0
      %890 = vmatprep.subr.mxu0 0.0
      %891 = vmatpush1.msra.mxu0 0.0
      %892 = vmatprep.subr.mxu0 0.0
      %893 = vmatpush1.msra.mxu0 0.0
      %894 = vmatprep.subr.mxu0 0.0
      %895 = vmatpush1.msra.mxu0 0.0
      %896 = vmatprep.subr.mxu0 0.0
      %897 = vmatpush1.msra.mxu0 0.0
      %898 = vmatprep.subr.mxu0 0.0
      %899 = vmatpush1.msra.mxu0 0.0
      %900 = vmatprep.mubr.f32.mxu0 0.0
      %901 = vmatmul.mubr.f32.gmra.mrb[0].mxu0 %v763
      %v902 = vpop.f32.mrb[0].mxu0
      %v903 = vadd.f32 %v760, %v902
      %v904 = vpop.f32.mrb[0].mxu0
      %905 = vdwg.mxu0
      %v906 = vmax.f32 %v832, 0.0
      %v907 = vmax.f32 %v834, 0.0
      %v908 = vmax.f32 %v903, 0.0
      %v909 = vmul.f32 %v906, %v313
      %v910 = vmul.f32 %v907, %v317
      %v911 = vmul.f32 %v908, %v321
      %912 = vst [vmem:[#allocation2 + $0x8] sm:$0xff] %v909
      %913 = vst [vmem:[#allocation2 + $0x10] sm:$0xff] %v910
      %914 = vst [vmem:[#allocation2 + $0x18] sm:$0xff] %v911
      %v915 = vld [vmem:[#allocation2] sm:$0xf]
      %v916 = vld [vmem:[#allocation2 + $0x8] sm:$0xf]
      %v917 = vld [vmem:[#allocation2 + $0x10] sm:$0xf]
      %v918 = vld [vmem:[#allocation2 + $0x18] sm:$0xf]
      %923 = vrot.lane.b32.xlu0 %v915, 50
      %v924 = vpop.permute.xlu0 %923
      %925 = vrot.lane.b32.xlu0 %v916, 50
      %v926 = vpop.permute.xlu0 %925
      %927 = vrot.lane.b32.xlu0 %v917, 50
      %v928 = vpop.permute.xlu0 %927
      %929 = vrot.lane.b32.xlu0 %v918, 50
      %v930 = vpop.permute.xlu0 %929
      %vm931 = vcmask 408576
      %v932 = vsel %vm931, %v924, %v926
      %v933 = vsel %vm931, %v926, %v928
      %v934 = vsel %vm931, %v928, %v930
      %938 = vst [vmem:[#allocation3] sm:$0xf] %v932
      %939 = vst [vmem:[#allocation3 + $0x8] sm:$0xf] %v933
      %940 = vst [vmem:[#allocation3 + $0x10] sm:$0xf] %v934
      %v941 = vld [vmem:[#allocation2] sm:$0xf]
      %v942 = vld [vmem:[#allocation2 + $0x8] sm:$0xf]
      %v943 = vld [vmem:[#allocation2 + $0x10] sm:$0xf]
      %v944 = vld [vmem:[#allocation2 + $0x18] sm:$0xf]
      %v949 = vrot.slane %v941, 4
      %v950 = vrot.slane %v942, 4
      %v951 = vrot.slane %v943, 4
      %v952 = vrot.slane %v944, 4
      %953 = vrot.lane.b32.xlu0 %v949, 48
      %v954 = vpop.permute.xlu0 %953
      %955 = vrot.lane.b32.xlu0 %v950, 48
      %v956 = vpop.permute.xlu0 %955
      %957 = vrot.lane.b32.xlu0 %v951, 48
      %v958 = vpop.permute.xlu0 %957
      %959 = vrot.lane.b32.xlu0 %v952, 48
      %v960 = vpop.permute.xlu0 %959
      %vm961 = vcmask 392192
      %v962 = vsel %vm961, %v954, %v956
      %v963 = vsel %vm961, %v956, %v958
      %v964 = vsel %vm961, %v958, %v960
      %968 = vst [vmem:[#allocation3] sm:$0xf0] %v962
      %969 = vst [vmem:[#allocation3 + $0x8] sm:$0xf0] %v963
      %970 = vst [vmem:[#allocation3 + $0x10] sm:$0xf0] %v964
      %v971 = vld [vmem:[#allocation2] sm:$0xf]
      %v972 = vld [vmem:[#allocation2 + $0x8] sm:$0xf]
      %v973 = vld [vmem:[#allocation2 + $0x10] sm:$0xf]
      %v974 = vld [vmem:[#allocation2 + $0x18] sm:$0xf]
      %979 = vrot.lane.b32.xlu0 %v971, 46
      %v980 = vpop.permute.xlu0 %979
      %981 = vrot.lane.b32.xlu0 %v972, 46
      %v982 = vpop.permute.xlu0 %981
      %983 = vrot.lane.b32.xlu0 %v973, 46
      %v984 = vpop.permute.xlu0 %983
      %985 = vrot.lane.b32.xlu0 %v974, 46
      %v986 = vpop.permute.xlu0 %985
      %vm987 = vcmask 375808
      %v988 = vsel %vm987, %v980, %v982
      %v989 = vsel %vm987, %v982, %v984
      %v990 = vsel %vm987, %v984, %v986
      %994 = vst [vmem:[#allocation3 + $0x18] sm:$0xf] %v988
      %995 = vst [vmem:[#allocation3 + $0x20] sm:$0xf] %v989
      %996 = vst [vmem:[#allocation3 + $0x28] sm:$0xf] %v990
      %v997 = vld [vmem:[#allocation2] sm:$0xf]
      %v998 = vld [vmem:[#allocation2 + $0x8] sm:$0xf]
      %v999 = vld [vmem:[#allocation2 + $0x10] sm:$0xf]
      %v1000 = vld [vmem:[#allocation2 + $0x18] sm:$0xf]
      %v1005 = vrot.slane %v997, 4
      %v1006 = vrot.slane %v998, 4
      %v1007 = vrot.slane %v999, 4
      %v1008 = vrot.slane %v1000, 4
      %1009 = vrot.lane.b32.xlu0 %v1005, 2
      %v1010 = vpop.permute.xlu0 %1009
      %1011 = vrot.lane.b32.xlu0 %v1006, 2
      %v1012 = vpop.permute.xlu0 %1011
      %1013 = vrot.lane.b32.xlu0 %v1007, 2
      %v1014 = vpop.permute.xlu0 %1013
      %1015 = vrot.lane.b32.xlu0 %v1008, 2
      %v1016 = vpop.permute.xlu0 %1015
      %vm1017 = vcmask 15360
      %v1018 = vsel %vm1017, %v1010, %v1012
      %v1019 = vsel %vm1017, %v1012, %v1014
      %v1020 = vsel %vm1017, %v1014, %v1016
      %1024 = vst [vmem:[#allocation3 + $0x18] sm:$0xf0] %v1018
      %1025 = vst [vmem:[#allocation3 + $0x20] sm:$0xf0] %v1019
      %1026 = vst [vmem:[#allocation3 + $0x28] sm:$0xf0] %v1020
      %v1027 = vld [vmem:[#allocation2 + $0x8] sm:$0xf]
      %v1028 = vld [vmem:[#allocation2 + $0x10] sm:$0xf]
      %v1029 = vld [vmem:[#allocation2 + $0x18] sm:$0xf]
      %1030 = vst [vmem:[#allocation3 + $0x30] sm:$0xf] %v1027
      %1031 = vst [vmem:[#allocation3 + $0x38] sm:$0xf] %v1028
      %1032 = vst [vmem:[#allocation3 + $0x40] sm:$0xf] %v1029
      %v1033 = vld [vmem:[#allocation2 + $0x8] sm:$0xf]
      %v1034 = vld [vmem:[#allocation2 + $0x10] sm:$0xf]
      %v1035 = vld [vmem:[#allocation2 + $0x18] sm:$0xf]
      %v1036 = vld [vmem:[#allocation2 + $0x20] sm:$0xf]
      %v1041 = vrot.slane %v1033, 4
      %v1042 = vrot.slane %v1034, 4
      %v1043 = vrot.slane %v1035, 4
      %v1044 = vrot.slane %v1036, 4
      %1045 = vrot.lane.b32.xlu0 %v1041, 126
      %v1046 = vpop.permute.xlu0 %1045
      %1047 = vrot.lane.b32.xlu0 %v1042, 126
      %v1048 = vpop.permute.xlu0 %1047
      %1049 = vrot.lane.b32.xlu0 %v1043, 126
      %v1050 = vpop.permute.xlu0 %1049
      %1051 = vrot.lane.b32.xlu0 %v1044, 126
      %v1052 = vpop.permute.xlu0 %1051
      %vm1053 = vcmask 1031168
      %v1054 = vsel %vm1053, %v1046, %v1048
      %v1055 = vsel %vm1053, %v1048, %v1050
      %v1056 = vsel %vm1053, %v1050, %v1052
      %1060 = vst [vmem:[#allocation3 + $0x30] sm:$0xf0] %v1054
      %1061 = vst [vmem:[#allocation3 + $0x38] sm:$0xf0] %v1055
      %1062 = vst [vmem:[#allocation3 + $0x40] sm:$0xf0] %v1056
      %v1063 = vld [vmem:[#allocation2 + $0x8] sm:$0xf]
      %v1064 = vld [vmem:[#allocation2 + $0x10] sm:$0xf]
      %v1065 = vld [vmem:[#allocation2 + $0x18] sm:$0xf]
      %v1066 = vld [vmem:[#allocation2 + $0x20] sm:$0xf]
      %1071 = vrot.lane.b32.xlu0 %v1063, 82
      %v1072 = vpop.permute.xlu0 %1071
      %1073 = vrot.lane.b32.xlu0 %v1064, 82
      %v1074 = vpop.permute.xlu0 %1073
      %1075 = vrot.lane.b32.xlu0 %v1065, 82
      %v1076 = vpop.permute.xlu0 %1075
      %1077 = vrot.lane.b32.xlu0 %v1066, 82
      %v1078 = vpop.permute.xlu0 %1077
      %vm1079 = vcmask 670720
      %v1080 = vsel %vm1079, %v1072, %v1074
      %v1081 = vsel %vm1079, %v1074, %v1076
      %v1082 = vsel %vm1079, %v1076, %v1078
      %1086 = vst [vmem:[#allocation3 + $0x48] sm:$0xf] %v1080
      %1087 = vst [vmem:[#allocation3 + $0x50] sm:$0xf] %v1081
      %1088 = vst [vmem:[#allocation3 + $0x58] sm:$0xf] %v1082
      %v1089 = vld [vmem:[#allocation2 + $0x8] sm:$0xf]
      %v1090 = vld [vmem:[#allocation2 + $0x10] sm:$0xf]
      %v1091 = vld [vmem:[#allocation2 + $0x18] sm:$0xf]
      %v1092 = vld [vmem:[#allocation2 + $0x20] sm:$0xf]
      %v1097 = vrot.slane %v1089, 4
      %v1098 = vrot.slane %v1090, 4
      %v1099 = vrot.slane %v1091, 4
      %v1100 = vrot.slane %v1092, 4
      %1101 = vrot.lane.b32.xlu0 %v1097, 80
      %v1102 = vpop.permute.xlu0 %1101
      %1103 = vrot.lane.b32.xlu0 %v1098, 80
      %v1104 = vpop.permute.xlu0 %1103
      %1105 = vrot.lane.b32.xlu0 %v1099, 80
      %v1106 = vpop.permute.xlu0 %1105
      %1107 = vrot.lane.b32.xlu0 %v1100, 80
      %v1108 = vpop.permute.xlu0 %1107
      %vm1109 = vcmask 654336
      %v1110 = vsel %vm1109, %v1102, %v1104
      %v1111 = vsel %vm1109, %v1104, %v1106
      %v1112 = vsel %vm1109, %v1106, %v1108
      %1116 = vst [vmem:[#allocation3 + $0x48] sm:$0xf0] %v1110
      %1117 = vst [vmem:[#allocation3 + $0x50] sm:$0xf0] %v1111
      %1118 = vst [vmem:[#allocation3 + $0x58] sm:$0xf0] %v1112
      %v1119 = vld [vmem:[#allocation2 + $0x8] sm:$0xf]
      %v1120 = vld [vmem:[#allocation2 + $0x10] sm:$0xf]
      %v1121 = vld [vmem:[#allocation2 + $0x18] sm:$0xf]
      %v1122 = vld [vmem:[#allocation2 + $0x20] sm:$0xf]
      %1127 = vrot.lane.b32.xlu0 %v1119, 78
      %v1128 = vpop.permute.xlu0 %1127
      %1129 = vrot.lane.b32.xlu0 %v1120, 78
      %v1130 = vpop.permute.xlu0 %1129
      %1131 = vrot.lane.b32.xlu0 %v1121, 78
      %v1132 = vpop.permute.xlu0 %1131
      %1133 = vrot.lane.b32.xlu0 %v1122, 78
      %v1134 = vpop.permute.xlu0 %1133
      %vm1135 = vcmask 637952
      %v1136 = vsel %vm1135, %v1128, %v1130
      %v1137 = vsel %vm1135, %v1130, %v1132
      %v1138 = vsel %vm1135, %v1132, %v1134
      %1142 = vst [vmem:[#allocation3 + $0x60] sm:$0xf] %v1136
      %1143 = vst [vmem:[#allocation3 + $0x68] sm:$0xf] %v1137
      %1144 = vst [vmem:[#allocation3 + $0x70] sm:$0xf] %v1138
      %v1145 = vld [vmem:[#allocation2] sm:$0xf0]
      %v1146 = vld [vmem:[#allocation2 + $0x8] sm:$0xf0]
      %v1147 = vld [vmem:[#allocation2 + $0x10] sm:$0xf0]
      %v1148 = vld [vmem:[#allocation2 + $0x18] sm:$0xf0]
      %1153 = vrot.lane.b32.xlu0 %v1145, 100
      %v1154 = vpop.permute.xlu0 %1153
      %1155 = vrot.lane.b32.xlu0 %v1146, 100
      %v1156 = vpop.permute.xlu0 %1155
      %1157 = vrot.lane.b32.xlu0 %v1147, 100
      %v1158 = vpop.permute.xlu0 %1157
      %1159 = vrot.lane.b32.xlu0 %v1148, 100
      %v1160 = vpop.permute.xlu0 %1159
      %vm1161 = vcmask 818176
      %v1162 = vsel %vm1161, %v1154, %v1156
      %v1163 = vsel %vm1161, %v1156, %v1158
      %v1164 = vsel %vm1161, %v1158, %v1160
      %1168 = vst [vmem:[#allocation3 + $0x60] sm:$0xf0] %v1162
      %1169 = vst [vmem:[#allocation3 + $0x68] sm:$0xf0] %v1163
      %1170 = vst [vmem:[#allocation3 + $0x70] sm:$0xf0] %v1164
      %v1171 = vld [vmem:[#allocation2] sm:$0xf0]
      %v1172 = vld [vmem:[#allocation2 + $0x8] sm:$0xf0]
      %v1173 = vld [vmem:[#allocation2 + $0x10] sm:$0xf0]
      %v1174 = vld [vmem:[#allocation2 + $0x18] sm:$0xf0]
      %v1179 = vrot.slane %v1171, 4
      %v1180 = vrot.slane %v1172, 4
      %v1181 = vrot.slane %v1173, 4
      %v1182 = vrot.slane %v1174, 4
      %1183 = vrot.lane.b32.xlu0 %v1179, 96
      %v1184 = vpop.permute.xlu0 %1183
      %1185 = vrot.lane.b32.xlu0 %v1180, 96
      %v1186 = vpop.permute.xlu0 %1185
      %1187 = vrot.lane.b32.xlu0 %v1181, 96
      %v1188 = vpop.permute.xlu0 %1187
      %1189 = vrot.lane.b32.xlu0 %v1182, 96
      %v1190 = vpop.permute.xlu0 %1189
      %vm1191 = vcmask 785408
      %v1192 = vsel %vm1191, %v1184, %v1186
      %v1193 = vsel %vm1191, %v1186, %v1188
      %v1194 = vsel %vm1191, %v1188, %v1190
      %1198 = vst [vmem:[#allocation3 + $0x78] sm:$0xf] %v1192
      %1199 = vst [vmem:[#allocation3 + $0x80] sm:$0xf] %v1193
      %1200 = vst [vmem:[#allocation3 + $0x88] sm:$0xf] %v1194
      %v1201 = vld [vmem:[#allocation2] sm:$0xf0]
      %v1202 = vld [vmem:[#allocation2 + $0x8] sm:$0xf0]
      %v1203 = vld [vmem:[#allocation2 + $0x10] sm:$0xf0]
      %v1204 = vld [vmem:[#allocation2 + $0x18] sm:$0xf0]
      %1209 = vrot.lane.b32.xlu0 %v1201, 92
      %v1210 = vpop.permute.xlu0 %1209
      %1211 = vrot.lane.b32.xlu0 %v1202, 92
      %v1212 = vpop.permute.xlu0 %1211
      %1213 = vrot.lane.b32.xlu0 %v1203, 92
      %v1214 = vpop.permute.xlu0 %1213
      %1215 = vrot.lane.b32.xlu0 %v1204, 92
      %v1216 = vpop.permute.xlu0 %1215
      %vm1217 = vcmask 752640
      %v1218 = vsel %vm1217, %v1210, %v1212
      %v1219 = vsel %vm1217, %v1212, %v1214
      %v1220 = vsel %vm1217, %v1214, %v1216
      %1224 = vst [vmem:[#allocation3 + $0x78] sm:$0xf0] %v1218
      %1225 = vst [vmem:[#allocation3 + $0x80] sm:$0xf0] %v1219
      %1226 = vst [vmem:[#allocation3 + $0x88] sm:$0xf0] %v1220
      %v1227 = vld [vmem:[#allocation2] sm:$0xf0]
      %v1228 = vld [vmem:[#allocation2 + $0x8] sm:$0xf0]
      %v1229 = vld [vmem:[#allocation2 + $0x10] sm:$0xf0]
      %v1230 = vld [vmem:[#allocation2 + $0x18] sm:$0xf0]
      %v1235 = vrot.slane %v1227, 4
      %v1236 = vrot.slane %v1228, 4
      %v1237 = vrot.slane %v1229, 4
      %v1238 = vrot.slane %v1230, 4
      %1239 = vrot.lane.b32.xlu0 %v1235, 4
      %v1240 = vpop.permute.xlu0 %1239
      %1241 = vrot.lane.b32.xlu0 %v1236, 4
      %v1242 = vpop.permute.xlu0 %1241
      %1243 = vrot.lane.b32.xlu0 %v1237, 4
      %v1244 = vpop.permute.xlu0 %1243
      %1245 = vrot.lane.b32.xlu0 %v1238, 4
      %v1246 = vpop.permute.xlu0 %1245
      %vm1247 = vcmask 31744
      %v1248 = vsel %vm1247, %v1240, %v1242
      %v1249 = vsel %vm1247, %v1242, %v1244
      %v1250 = vsel %vm1247, %v1244, %v1246
      %1254 = vst [vmem:[#allocation3 + $0x90] sm:$0xf] %v1248
      %1255 = vst [vmem:[#allocation3 + $0x98] sm:$0xf] %v1249
      %1256 = vst [vmem:[#allocation3 + $0xa0] sm:$0xf] %v1250
      %v1257 = vld [vmem:[#allocation2 + $0x8] sm:$0xf0]
      %v1258 = vld [vmem:[#allocation2 + $0x10] sm:$0xf0]
      %v1259 = vld [vmem:[#allocation2 + $0x18] sm:$0xf0]
      %1260 = vst [vmem:[#allocation3 + $0x90] sm:$0xf0] %v1257
      %1261 = vst [vmem:[#allocation3 + $0x98] sm:$0xf0] %v1258
      %1262 = vst [vmem:[#allocation3 + $0xa0] sm:$0xf0] %v1259
      %v1263 = vld [vmem:[#allocation2 + $0x8] sm:$0xf0]
      %v1264 = vld [vmem:[#allocation2 + $0x10] sm:$0xf0]
      %v1265 = vld [vmem:[#allocation2 + $0x18] sm:$0xf0]
      %v1266 = vld [vmem:[#allocation2 + $0x20] sm:$0xf0]
      %v1271 = vrot.slane %v1263, 4
      %v1272 = vrot.slane %v1264, 4
      %v1273 = vrot.slane %v1265, 4
      %v1274 = vrot.slane %v1266, 4
      %1275 = vrot.lane.b32.xlu0 %v1271, 124
      %v1276 = vpop.permute.xlu0 %1275
      %1277 = vrot.lane.b32.xlu0 %v1272, 124
      %v1278 = vpop.permute.xlu0 %1277
      %1279 = vrot.lane.b32.xlu0 %v1273, 124
      %v1280 = vpop.permute.xlu0 %1279
      %1281 = vrot.lane.b32.xlu0 %v1274, 124
      %v1282 = vpop.permute.xlu0 %1281
      %vm1283 = vcmask 1014784
      %v1284 = vsel %vm1283, %v1276, %v1278
      %v1285 = vsel %vm1283, %v1278, %v1280
      %v1286 = vsel %vm1283, %v1280, %v1282
      %1290 = vst [vmem:[#allocation3 + $0xa8] sm:$0xf] %v1284
      %1291 = vst [vmem:[#allocation3 + $0xb0] sm:$0xf] %v1285
      %1292 = vst [vmem:[#allocation3 + $0xb8] sm:$0xf] %v1286
      %v1293 = vld [vmem:[#allocation2 + $0x8] sm:$0xf0]
      %v1294 = vld [vmem:[#allocation2 + $0x10] sm:$0xf0]
      %v1295 = vld [vmem:[#allocation2 + $0x18] sm:$0xf0]
      %v1296 = vld [vmem:[#allocation2 + $0x20] sm:$0xf0]
      %1301 = vrot.lane.b32.xlu0 %v1293, 36
      %v1302 = vpop.permute.xlu0 %1301
      %1303 = vrot.lane.b32.xlu0 %v1294, 36
      %v1304 = vpop.permute.xlu0 %1303
      %1305 = vrot.lane.b32.xlu0 %v1295, 36
      %v1306 = vpop.permute.xlu0 %1305
      %1307 = vrot.lane.b32.xlu0 %v1296, 36
      %v1308 = vpop.permute.xlu0 %1307
      %vm1309 = vcmask 293888
      %v1310 = vsel %vm1309, %v1302, %v1304
      %v1311 = vsel %vm1309, %v1304, %v1306
      %v1312 = vsel %vm1309, %v1306, %v1308
      %1316 = vst [vmem:[#allocation3 + $0xa8] sm:$0xf0] %v1310
      %1317 = vst [vmem:[#allocation3 + $0xb0] sm:$0xf0] %v1311
      %1318 = vst [vmem:[#allocation3 + $0xb8] sm:$0xf0] %v1312
      %v1319 = vld [vmem:[#allocation2 + $0x8] sm:$0xf0]
      %v1320 = vld [vmem:[#allocation2 + $0x10] sm:$0xf0]
      %v1321 = vld [vmem:[#allocation2 + $0x18] sm:$0xf0]
      %v1322 = vld [vmem:[#allocation2 + $0x20] sm:$0xf0]
      %v1327 = vrot.slane %v1319, 4
      %v1328 = vrot.slane %v1320, 4
      %v1329 = vrot.slane %v1321, 4
      %v1330 = vrot.slane %v1322, 4
      %1331 = vrot.lane.b32.xlu0 %v1327, 32
      %v1332 = vpop.permute.xlu0 %1331
      %1333 = vrot.lane.b32.xlu0 %v1328, 32
      %v1334 = vpop.permute.xlu0 %1333
      %1335 = vrot.lane.b32.xlu0 %v1329, 32
      %v1336 = vpop.permute.xlu0 %1335
      %1337 = vrot.lane.b32.xlu0 %v1330, 32
      %v1338 = vpop.permute.xlu0 %1337
      %vm1339 = vcmask 261120
      %v1340 = vsel %vm1339, %v1332, %v1334
      %v1341 = vsel %vm1339, %v1334, %v1336
      %v1342 = vsel %vm1339, %v1336, %v1338
      %1346 = vst [vmem:[#allocation3 + $0xc0] sm:$0xf] %v1340
      %1347 = vst [vmem:[#allocation3 + $0xc8] sm:$0xf] %v1341
      %1348 = vst [vmem:[#allocation3 + $0xd0] sm:$0xf] %v1342
      %v1349 = vld [vmem:[#allocation2 + $0x8] sm:$0xf0]
      %v1350 = vld [vmem:[#allocation2 + $0x10] sm:$0xf0]
      %v1351 = vld [vmem:[#allocation2 + $0x18] sm:$0xf0]
      %v1352 = vld [vmem:[#allocation2 + $0x20] sm:$0xf0]
      %1357 = vrot.lane.b32.xlu0 %v1349, 28
      %v1358 = vpop.permute.xlu0 %1357
      %1359 = vrot.lane.b32.xlu0 %v1350, 28
      %v1360 = vpop.permute.xlu0 %1359
      %1361 = vrot.lane.b32.xlu0 %v1351, 28
      %v1362 = vpop.permute.xlu0 %1361
      %1363 = vrot.lane.b32.xlu0 %v1352, 28
      %v1364 = vpop.permute.xlu0 %1363
      %vm1365 = vcmask 228352
      %v1366 = vsel %vm1365, %v1358, %v1360
      %v1367 = vsel %vm1365, %v1360, %v1362
      %v1368 = vsel %vm1365, %v1362, %v1364
      %1372 = vst [vmem:[#allocation3 + $0xc0] sm:$0xf0] %v1366
      %1373 = vst [vmem:[#allocation3 + $0xc8] sm:$0xf0] %v1367
      %1374 = vst [vmem:[#allocation3 + $0xd0] sm:$0xf0] %v1368
      %v1375 = vld [vmem:[%s4] sm:$0xff]
      %v1376 = vld [vmem:[#allocation3] sm:$0xff]
      %v1377 = vld [vmem:[#allocation3 + $0x8] sm:$0xff]
      %v1378 = vld [vmem:[#allocation3 + $0x10] sm:$0xff]
      %v1379 = vld [vmem:[#allocation3 + $0x18] sm:$0xff]
      %v1380 = vld [vmem:[#allocation3 + $0x20] sm:$0xff]
      %v1381 = vld [vmem:[#allocation3 + $0x28] sm:$0xff]
      %v1382 = vld [vmem:[#allocation3 + $0x30] sm:$0xff]
      %v1383 = vld [vmem:[#allocation3 + $0x38] sm:$0xff]
      %v1384 = vld [vmem:[#allocation3 + $0x40] sm:$0xff]
      %v1385 = vld [vmem:[#allocation3 + $0x48] sm:$0xff]
      %v1386 = vld [vmem:[#allocation3 + $0x50] sm:$0xff]
      %v1387 = vld [vmem:[#allocation3 + $0x58] sm:$0xff]
      %v1388 = vld [vmem:[#allocation3 + $0x60] sm:$0xff]
      %v1389 = vld [vmem:[#allocation3 + $0x68] sm:$0xff]
      %v1390 = vld [vmem:[#allocation3 + $0x70] sm:$0xff]
      %v1391 = vld [vmem:[#allocation3 + $0x78] sm:$0xff]
      %v1392 = vld [vmem:[#allocation3 + $0x80] sm:$0xff]
      %v1393 = vld [vmem:[#allocation3 + $0x88] sm:$0xff]
      %v1394 = vld [vmem:[#allocation3 + $0x90] sm:$0xff]
      %v1395 = vld [vmem:[#allocation3 + $0x98] sm:$0xff]
      %v1396 = vld [vmem:[#allocation3 + $0xa0] sm:$0xff]
      %v1397 = vld [vmem:[#allocation3 + $0xa8] sm:$0xff]
      %v1398 = vld [vmem:[#allocation3 + $0xb0] sm:$0xff]
      %v1399 = vld [vmem:[#allocation3 + $0xb8] sm:$0xff]
      %v1400 = vld [vmem:[#allocation3 + $0xc0] sm:$0xff]
      %v1401 = vld [vmem:[#allocation3 + $0xc8] sm:$0xff]
      %v1402 = vld [vmem:[#allocation3 + $0xd0] sm:$0xff]
      %v1403 = vld [vmem:[%s5] sm:$0xff]
      %1405 = vset.pattern.permute.xlu0 0
      %1406 = vperm.xlu0 %1405, %v1403
      %v1407 = vpop.permute.xlu0 %1406
      %v1410 = vsel %vm563, %v1375, 0
      %1412 = vmatprep.subr.mxu0 %v1377
      %1413 = vmatpush1.msra.mxu0 %v1376
      %1414 = vmatprep.subr.mxu0 %v1380
      %1415 = vmatpush1.msra.mxu0 %v1379
      %1416 = vmatprep.subr.mxu0 %v1383
      %1417 = vmatpush1.msra.mxu0 %v1382
      %1418 = vmatprep.subr.mxu0 %v1386
      %1419 = vmatpush1.msra.mxu0 %v1385
      %1420 = vmatprep.subr.mxu0 %v1389
      %1421 = vmatpush1.msra.mxu0 %v1388
      %1422 = vmatprep.subr.mxu0 %v1392
      %1423 = vmatpush1.msra.mxu0 %v1391
      %1424 = vmatprep.subr.mxu0 %v1395
      %1425 = vmatpush1.msra.mxu0 %v1394
      %1426 = vmatprep.subr.mxu0 %v1398
      %1427 = vmatpush1.msra.mxu0 %v1397
      %1428 = vmatprep.subr.mxu0 %v1401
      %1429 = vmatpush1.msra.mxu0 %v1400
      %1430 = vmatprep.subr.mxu0 0.0
      %1431 = vmatpush1.msra.mxu0 0.0
      %1432 = vmatprep.subr.mxu0 0.0
      %1433 = vmatpush1.msra.mxu0 0.0
      %1434 = vmatprep.subr.mxu0 0.0
      %1435 = vmatpush1.msra.mxu0 0.0
      %1436 = vmatprep.subr.mxu0 0.0
      %1437 = vmatpush1.msra.mxu0 0.0
      %1438 = vmatprep.subr.mxu0 0.0
      %1439 = vmatpush1.msra.mxu0 0.0
      %1440 = vmatprep.subr.mxu0 0.0
      %1441 = vmatpush1.msra.mxu0 0.0
      %1442 = vmatprep.subr.mxu0 0.0
      %1443 = vmatpush1.msra.mxu0 0.0
      %1444 = vmatprep.subr.mxu0 0.0
      %1445 = vmatpush1.msra.mxu0 0.0
      %1446 = vmatprep.subr.mxu0 0.0
      %1447 = vmatpush1.msra.mxu0 0.0
      %1448 = vmatprep.subr.mxu0 0.0
      %1449 = vmatpush1.msra.mxu0 0.0
      %1450 = vmatprep.subr.mxu0 0.0
      %1451 = vmatpush1.msra.mxu0 0.0
      %1452 = vmatprep.subr.mxu0 0.0
      %1453 = vmatpush1.msra.mxu0 0.0
      %1454 = vmatprep.subr.mxu0 0.0
      %1455 = vmatpush1.msra.mxu0 0.0
      %1456 = vmatprep.subr.mxu0 0.0
      %1457 = vmatpush1.msra.mxu0 0.0
      %1458 = vmatprep.subr.mxu0 0.0
      %1459 = vmatpush1.msra.mxu0 0.0
      %1460 = vmatprep.subr.mxu0 0.0
      %1461 = vmatpush1.msra.mxu0 0.0
      %1462 = vmatprep.subr.mxu0 0.0
      %1463 = vmatpush1.msra.mxu0 0.0
      %1464 = vmatprep.subr.mxu0 0.0
      %1465 = vmatpush1.msra.mxu0 0.0
      %1466 = vmatprep.subr.mxu0 0.0
      %1467 = vmatpush1.msra.mxu0 0.0
      %1468 = vmatprep.subr.mxu0 0.0
      %1469 = vmatpush1.msra.mxu0 0.0
      %1470 = vmatprep.subr.mxu0 0.0
      %1471 = vmatpush1.msra.mxu0 0.0
      %1472 = vmatprep.subr.mxu0 0.0
      %1473 = vmatpush1.msra.mxu0 0.0
      %1474 = vmatprep.subr.mxu0 0.0
      %1475 = vmatpush1.msra.mxu0 0.0
      %1476 = vmatprep.mubr.f32.mxu0 0.0
      %1477 = vmatmul.mubr.f32.gmra.mrb[0].mxu0 %v1410
      %v1478 = vpop.f32.mrb[0].mxu0
      %v1479 = vadd.f32 %v1407, %v1478
      %v1480 = vpop.f32.mrb[0].mxu0
      %v1481 = vadd.f32 %v1407, %v1480
      %1482 = vdwg.mxu0
      %1483 = vmatprep.subr.mxu0 0.0
      %1484 = vmatpush1.msra.mxu0 %v1378
      %1485 = vmatprep.subr.mxu0 0.0
      %1486 = vmatpush1.msra.mxu0 %v1381
      %1487 = vmatprep.subr.mxu0 0.0
      %1488 = vmatpush1.msra.mxu0 %v1384
      %1489 = vmatprep.subr.mxu0 0.0
      %1490 = vmatpush1.msra.mxu0 %v1387
      %1491 = vmatprep.subr.mxu0 0.0
      %1492 = vmatpush1.msra.mxu0 %v1390
      %1493 = vmatprep.subr.mxu0 0.0
      %1494 = vmatpush1.msra.mxu0 %v1393
      %1495 = vmatprep.subr.mxu0 0.0
      %1496 = vmatpush1.msra.mxu0 %v1396
      %1497 = vmatprep.subr.mxu0 0.0
      %1498 = vmatpush1.msra.mxu0 %v1399
      %1499 = vmatprep.subr.mxu0 0.0
      %1500 = vmatpush1.msra.mxu0 %v1402
      %1501 = vmatprep.subr.mxu0 0.0
      %1502 = vmatpush1.msra.mxu0 0.0
      %1503 = vmatprep.subr.mxu0 0.0
      %1504 = vmatpush1.msra.mxu0 0.0
      %1505 = vmatprep.subr.mxu0 0.0
      %1506 = vmatpush1.msra.mxu0 0.0
      %1507 = vmatprep.subr.mxu0 0.0
      %1508 = vmatpush1.msra.mxu0 0.0
      %1509 = vmatprep.subr.mxu0 0.0
      %1510 = vmatpush1.msra.mxu0 0.0
      %1511 = vmatprep.subr.mxu0 0.0
      %1512 = vmatpush1.msra.mxu0 0.0
      %1513 = vmatprep.subr.mxu0 0.0
      %1514 = vmatpush1.msra.mxu0 0.0
      %1515 = vmatprep.subr.mxu0 0.0
      %1516 = vmatpush1.msra.mxu0 0.0
      %1517 = vmatprep.subr.mxu0 0.0
      %1518 = vmatpush1.msra.mxu0 0.0
      %1519 = vmatprep.subr.mxu0 0.0
      %1520 = vmatpush1.msra.mxu0 0.0
      %1521 = vmatprep.subr.mxu0 0.0
      %1522 = vmatpush1.msra.mxu0 0.0
      %1523 = vmatprep.subr.mxu0 0.0
      %1524 = vmatpush1.msra.mxu0 0.0
      %1525 = vmatprep.subr.mxu0 0.0
      %1526 = vmatpush1.msra.mxu0 0.0
      %1527 = vmatprep.subr.mxu0 0.0
      %1528 = vmatpush1.msra.mxu0 0.0
      %1529 = vmatprep.subr.mxu0 0.0
      %1530 = vmatpush1.msra.mxu0 0.0
      %1531 = vmatprep.subr.mxu0 0.0
      %1532 = vmatpush1.msra.mxu0 0.0
      %1533 = vmatprep.subr.mxu0 0.0
      %1534 = vmatpush1.msra.mxu0 0.0
      %1535 = vmatprep.subr.mxu0 0.0
      %1536 = vmatpush1.msra.mxu0 0.0
      %1537 = vmatprep.subr.mxu0 0.0
      %1538 = vmatpush1.msra.mxu0 0.0
      %1539 = vmatprep.subr.mxu0 0.0
      %1540 = vmatpush1.msra.mxu0 0.0
      %1541 = vmatprep.subr.mxu0 0.0
      %1542 = vmatpush1.msra.mxu0 0.0
      %1543 = vmatprep.subr.mxu0 0.0
      %1544 = vmatpush1.msra.mxu0 0.0
      %1545 = vmatprep.subr.mxu0 0.0
      %1546 = vmatpush1.msra.mxu0 0.0
      %1547 = vmatprep.mubr.f32.mxu0 0.0
      %1548 = vmatmul.mubr.f32.gmra.mrb[0].mxu0 %v1410
      %v1549 = vpop.f32.mrb[0].mxu0
      %v1550 = vadd.f32 %v1407, %v1549
      %v1551 = vpop.f32.mrb[0].mxu0
      %1552 = vdwg.mxu0
      %v1553 = vmax.f32 %v1479, 0.0
      %v1554 = vmax.f32 %v1481, 0.0
      %v1555 = vmax.f32 %v1550, 0.0
      %v1556 = vmul.f32 %v1553, %v313
      %v1557 = vmul.f32 %v1554, %v317
      %v1558 = vmul.f32 %v1555, %v321
      %1559 = vst [vmem:[#allocation2 + $0x8] sm:$0xff] %v1556
      %1560 = vst [vmem:[#allocation2 + $0x10] sm:$0xff] %v1557
      %1561 = vst [vmem:[#allocation2 + $0x18] sm:$0xff] %v1558
      %v1562 = vld [vmem:[#allocation2] sm:$0xff]
      %v1563 = vld [vmem:[#allocation2 + $0x8] sm:$0xff]
      %v1564 = vld [vmem:[#allocation2 + $0x10] sm:$0xff]
      %v1565 = vld [vmem:[#allocation2 + $0x18] sm:$0xff]
      %1570 = vrot.lane.b32.xlu0 %v1562, 25
      %v1571 = vpop.permute.xlu0 %1570
      %1572 = vrot.lane.b32.xlu0 %v1563, 25
      %v1573 = vpop.permute.xlu0 %1572
      %1574 = vrot.lane.b32.xlu0 %v1564, 25
      %v1575 = vpop.permute.xlu0 %1574
      %1576 = vrot.lane.b32.xlu0 %v1565, 25
      %v1577 = vpop.permute.xlu0 %1576
      %v1578 = vsel %vm339, %v1571, %v1573
      %v1579 = vsel %vm339, %v1573, %v1575
      %v1580 = vsel %vm339, %v1575, %v1577
      %1584 = vst [vmem:[#allocation3] sm:$0xff] %v1578
      %1585 = vst [vmem:[#allocation3 + $0x8] sm:$0xff] %v1579
      %1586 = vst [vmem:[#allocation3 + $0x10] sm:$0xff] %v1580
      %v1587 = vld [vmem:[#allocation2] sm:$0xff]
      %v1588 = vld [vmem:[#allocation2 + $0x8] sm:$0xff]
      %v1589 = vld [vmem:[#allocation2 + $0x10] sm:$0xff]
      %v1590 = vld [vmem:[#allocation2 + $0x18] sm:$0xff]
      %1595 = vrot.lane.b32.xlu0 %v1587, 24
      %v1596 = vpop.permute.xlu0 %1595
      %1597 = vrot.lane.b32.xlu0 %v1588, 24
      %v1598 = vpop.permute.xlu0 %1597
      %1599 = vrot.lane.b32.xlu0 %v1589, 24
      %v1600 = vpop.permute.xlu0 %1599
      %1601 = vrot.lane.b32.xlu0 %v1590, 24
      %v1602 = vpop.permute.xlu0 %1601
      %v1603 = vsel %vm363, %v1596, %v1598
      %v1604 = vsel %vm363, %v1598, %v1600
      %v1605 = vsel %vm363, %v1600, %v1602
      %1609 = vst [vmem:[#allocation3 + $0x18] sm:$0xff] %v1603
      %1610 = vst [vmem:[#allocation3 + $0x20] sm:$0xff] %v1604
      %1611 = vst [vmem:[#allocation3 + $0x28] sm:$0xff] %v1605
      %v1612 = vld [vmem:[#allocation2] sm:$0xff]
      %v1613 = vld [vmem:[#allocation2 + $0x8] sm:$0xff]
      %v1614 = vld [vmem:[#allocation2 + $0x10] sm:$0xff]
      %v1615 = vld [vmem:[#allocation2 + $0x18] sm:$0xff]
      %1620 = vrot.lane.b32.xlu0 %v1612, 23
      %v1621 = vpop.permute.xlu0 %1620
      %1622 = vrot.lane.b32.xlu0 %v1613, 23
      %v1623 = vpop.permute.xlu0 %1622
      %1624 = vrot.lane.b32.xlu0 %v1614, 23
      %v1625 = vpop.permute.xlu0 %1624
      %1626 = vrot.lane.b32.xlu0 %v1615, 23
      %v1627 = vpop.permute.xlu0 %1626
      %v1628 = vsel %vm387, %v1621, %v1623
      %v1629 = vsel %vm387, %v1623, %v1625
      %v1630 = vsel %vm387, %v1625, %v1627
      %1634 = vst [vmem:[#allocation3 + $0x30] sm:$0xff] %v1628
      %1635 = vst [vmem:[#allocation3 + $0x38] sm:$0xff] %v1629
      %1636 = vst [vmem:[#allocation3 + $0x40] sm:$0xff] %v1630
      %v1637 = vld [vmem:[#allocation2] sm:$0xff]
      %v1638 = vld [vmem:[#allocation2 + $0x8] sm:$0xff]
      %v1639 = vld [vmem:[#allocation2 + $0x10] sm:$0xff]
      %v1640 = vld [vmem:[#allocation2 + $0x18] sm:$0xff]
      %1645 = vrot.lane.b32.xlu0 %v1637, 1
      %v1646 = vpop.permute.xlu0 %1645
      %1647 = vrot.lane.b32.xlu0 %v1638, 1
      %v1648 = vpop.permute.xlu0 %1647
      %1649 = vrot.lane.b32.xlu0 %v1639, 1
      %v1650 = vpop.permute.xlu0 %1649
      %1651 = vrot.lane.b32.xlu0 %v1640, 1
      %v1652 = vpop.permute.xlu0 %1651
      %v1653 = vsel %vm411, %v1646, %v1648
      %v1654 = vsel %vm411, %v1648, %v1650
      %v1655 = vsel %vm411, %v1650, %v1652
      %1659 = vst [vmem:[#allocation3 + $0x48] sm:$0xff] %v1653
      %1660 = vst [vmem:[#allocation3 + $0x50] sm:$0xff] %v1654
      %1661 = vst [vmem:[#allocation3 + $0x58] sm:$0xff] %v1655
      %v1662 = vld [vmem:[#allocation2 + $0x8] sm:$0xff]
      %v1663 = vld [vmem:[#allocation2 + $0x10] sm:$0xff]
      %v1664 = vld [vmem:[#allocation2 + $0x18] sm:$0xff]
      %1665 = vst [vmem:[#allocation3 + $0x60] sm:$0xff] %v1662
      %1666 = vst [vmem:[#allocation3 + $0x68] sm:$0xff] %v1663
      %1667 = vst [vmem:[#allocation3 + $0x70] sm:$0xff] %v1664
      %v1668 = vld [vmem:[#allocation2 + $0x8] sm:$0xff]
      %v1669 = vld [vmem:[#allocation2 + $0x10] sm:$0xff]
      %v1670 = vld [vmem:[#allocation2 + $0x18] sm:$0xff]
      %v1671 = vld [vmem:[#allocation2 + $0x20] sm:$0xff]
      %1676 = vrot.lane.b32.xlu0 %v1668, 127
      %v1677 = vpop.permute.xlu0 %1676
      %1678 = vrot.lane.b32.xlu0 %v1669, 127
      %v1679 = vpop.permute.xlu0 %1678
      %1680 = vrot.lane.b32.xlu0 %v1670, 127
      %v1681 = vpop.permute.xlu0 %1680
      %1682 = vrot.lane.b32.xlu0 %v1671, 127
      %v1683 = vpop.permute.xlu0 %1682
      %v1684 = vsel %vm443, %v1677, %v1679
      %v1685 = vsel %vm443, %v1679, %v1681
      %v1686 = vsel %vm443, %v1681, %v1683
      %1690 = vst [vmem:[#allocation3 + $0x78] sm:$0xff] %v1684
      %1691 = vst [vmem:[#allocation3 + $0x80] sm:$0xff] %v1685
      %1692 = vst [vmem:[#allocation3 + $0x88] sm:$0xff] %v1686
      %v1693 = vld [vmem:[#allocation2 + $0x8] sm:$0xff]
      %v1694 = vld [vmem:[#allocation2 + $0x10] sm:$0xff]
      %v1695 = vld [vmem:[#allocation2 + $0x18] sm:$0xff]
      %v1696 = vld [vmem:[#allocation2 + $0x20] sm:$0xff]
      %1701 = vrot.lane.b32.xlu0 %v1693, 105
      %v1702 = vpop.permute.xlu0 %1701
      %1703 = vrot.lane.b32.xlu0 %v1694, 105
      %v1704 = vpop.permute.xlu0 %1703
      %1705 = vrot.lane.b32.xlu0 %v1695, 105
      %v1706 = vpop.permute.xlu0 %1705
      %1707 = vrot.lane.b32.xlu0 %v1696, 105
      %v1708 = vpop.permute.xlu0 %1707
      %v1709 = vsel %vm467, %v1702, %v1704
      %v1710 = vsel %vm467, %v1704, %v1706
      %v1711 = vsel %vm467, %v1706, %v1708
      %1715 = vst [vmem:[#allocation3 + $0x90] sm:$0xff] %v1709
      %1716 = vst [vmem:[#allocation3 + $0x98] sm:$0xff] %v1710
      %1717 = vst [vmem:[#allocation3 + $0xa0] sm:$0xff] %v1711
      %v1718 = vld [vmem:[#allocation2 + $0x8] sm:$0xff]
      %v1719 = vld [vmem:[#allocation2 + $0x10] sm:$0xff]
      %v1720 = vld [vmem:[#allocation2 + $0x18] sm:$0xff]
      %v1721 = vld [vmem:[#allocation2 + $0x20] sm:$0xff]
      %1726 = vrot.lane.b32.xlu0 %v1718, 104
      %v1727 = vpop.permute.xlu0 %1726
      %1728 = vrot.lane.b32.xlu0 %v1719, 104
      %v1729 = vpop.permute.xlu0 %1728
      %1730 = vrot.lane.b32.xlu0 %v1720, 104
      %v1731 = vpop.permute.xlu0 %1730
      %1732 = vrot.lane.b32.xlu0 %v1721, 104
      %v1733 = vpop.permute.xlu0 %1732
      %v1734 = vsel %vm491, %v1727, %v1729
      %v1735 = vsel %vm491, %v1729, %v1731
      %v1736 = vsel %vm491, %v1731, %v1733
      %1740 = vst [vmem:[#allocation3 + $0xa8] sm:$0xff] %v1734
      %1741 = vst [vmem:[#allocation3 + $0xb0] sm:$0xff] %v1735
      %1742 = vst [vmem:[#allocation3 + $0xb8] sm:$0xff] %v1736
      %v1743 = vld [vmem:[#allocation2 + $0x8] sm:$0xff]
      %v1744 = vld [vmem:[#allocation2 + $0x10] sm:$0xff]
      %v1745 = vld [vmem:[#allocation2 + $0x18] sm:$0xff]
      %v1746 = vld [vmem:[#allocation2 + $0x20] sm:$0xff]
      %1751 = vrot.lane.b32.xlu0 %v1743, 103
      %v1752 = vpop.permute.xlu0 %1751
      %1753 = vrot.lane.b32.xlu0 %v1744, 103
      %v1754 = vpop.permute.xlu0 %1753
      %1755 = vrot.lane.b32.xlu0 %v1745, 103
      %v1756 = vpop.permute.xlu0 %1755
      %1757 = vrot.lane.b32.xlu0 %v1746, 103
      %v1758 = vpop.permute.xlu0 %1757
      %v1759 = vsel %vm515, %v1752, %v1754
      %v1760 = vsel %vm515, %v1754, %v1756
      %v1761 = vsel %vm515, %v1756, %v1758
      %1765 = vst [vmem:[#allocation3 + $0xc0] sm:$0xff] %v1759
      %1766 = vst [vmem:[#allocation3 + $0xc8] sm:$0xff] %v1760
      %1767 = vst [vmem:[#allocation3 + $0xd0] sm:$0xff] %v1761
      %v1768 = vld [vmem:[%s6] sm:$0xf]
      %v1769 = vld [vmem:[#allocation3] sm:$0xff]
      %v1770 = vld [vmem:[#allocation3 + $0x8] sm:$0xff]
      %v1771 = vld [vmem:[#allocation3 + $0x10] sm:$0xff]
      %v1772 = vld [vmem:[#allocation3 + $0x18] sm:$0xff]
      %v1773 = vld [vmem:[#allocation3 + $0x20] sm:$0xff]
      %v1774 = vld [vmem:[#allocation3 + $0x28] sm:$0xff]
      %v1775 = vld [vmem:[#allocation3 + $0x30] sm:$0xff]
      %v1776 = vld [vmem:[#allocation3 + $0x38] sm:$0xff]
      %v1777 = vld [vmem:[#allocation3 + $0x40] sm:$0xff]
      %v1778 = vld [vmem:[#allocation3 + $0x48] sm:$0xff]
      %v1779 = vld [vmem:[#allocation3 + $0x50] sm:$0xff]
      %v1780 = vld [vmem:[#allocation3 + $0x58] sm:$0xff]
      %v1781 = vld [vmem:[#allocation3 + $0x60] sm:$0xff]
      %v1782 = vld [vmem:[#allocation3 + $0x68] sm:$0xff]
      %v1783 = vld [vmem:[#allocation3 + $0x70] sm:$0xff]
      %v1784 = vld [vmem:[#allocation3 + $0x78] sm:$0xff]
      %v1785 = vld [vmem:[#allocation3 + $0x80] sm:$0xff]
      %v1786 = vld [vmem:[#allocation3 + $0x88] sm:$0xff]
      %v1787 = vld [vmem:[#allocation3 + $0x90] sm:$0xff]
      %v1788 = vld [vmem:[#allocation3 + $0x98] sm:$0xff]
      %v1789 = vld [vmem:[#allocation3 + $0xa0] sm:$0xff]
      %v1790 = vld [vmem:[#allocation3 + $0xa8] sm:$0xff]
      %v1791 = vld [vmem:[#allocation3 + $0xb0] sm:$0xff]
      %v1792 = vld [vmem:[#allocation3 + $0xb8] sm:$0xff]
      %v1793 = vld [vmem:[#allocation3 + $0xc0] sm:$0xff]
      %v1794 = vld [vmem:[#allocation3 + $0xc8] sm:$0xff]
      %v1795 = vld [vmem:[#allocation3 + $0xd0] sm:$0xff]
      %v1796 = vld [vmem:[%s7] sm:$0xf]
      %1798 = vset.pattern.permute.xlu0 0
      %1799 = vperm.xlu0 %1798, %v1796
      %v1800 = vpop.permute.xlu0 %1799
      %v1803 = vsel %vm563, %v1768, 0
      %1805 = vmatprep.subr.mxu0 %v1770
      %1806 = vmatpush1.msra.mxu0 %v1769
      %1807 = vmatprep.subr.mxu0 %v1773
      %1808 = vmatpush1.msra.mxu0 %v1772
      %1809 = vmatprep.subr.mxu0 %v1776
      %1810 = vmatpush1.msra.mxu0 %v1775
      %1811 = vmatprep.subr.mxu0 %v1779
      %1812 = vmatpush1.msra.mxu0 %v1778
      %1813 = vmatprep.subr.mxu0 %v1782
      %1814 = vmatpush1.msra.mxu0 %v1781
      %1815 = vmatprep.subr.mxu0 %v1785
      %1816 = vmatpush1.msra.mxu0 %v1784
      %1817 = vmatprep.subr.mxu0 %v1788
      %1818 = vmatpush1.msra.mxu0 %v1787
      %1819 = vmatprep.subr.mxu0 %v1791
      %1820 = vmatpush1.msra.mxu0 %v1790
      %1821 = vmatprep.subr.mxu0 %v1794
      %1822 = vmatpush1.msra.mxu0 %v1793
      %1823 = vmatprep.subr.mxu0 0.0
      %1824 = vmatpush1.msra.mxu0 0.0
      %1825 = vmatprep.subr.mxu0 0.0
      %1826 = vmatpush1.msra.mxu0 0.0
      %1827 = vmatprep.subr.mxu0 0.0
      %1828 = vmatpush1.msra.mxu0 0.0
      %1829 = vmatprep.subr.mxu0 0.0
      %1830 = vmatpush1.msra.mxu0 0.0
      %1831 = vmatprep.subr.mxu0 0.0
      %1832 = vmatpush1.msra.mxu0 0.0
      %1833 = vmatprep.subr.mxu0 0.0
      %1834 = vmatpush1.msra.mxu0 0.0
      %1835 = vmatprep.subr.mxu0 0.0
      %1836 = vmatpush1.msra.mxu0 0.0
      %1837 = vmatprep.subr.mxu0 0.0
      %1838 = vmatpush1.msra.mxu0 0.0
      %1839 = vmatprep.subr.mxu0 0.0
      %1840 = vmatpush1.msra.mxu0 0.0
      %1841 = vmatprep.subr.mxu0 0.0
      %1842 = vmatpush1.msra.mxu0 0.0
      %1843 = vmatprep.subr.mxu0 0.0
      %1844 = vmatpush1.msra.mxu0 0.0
      %1845 = vmatprep.subr.mxu0 0.0
      %1846 = vmatpush1.msra.mxu0 0.0
      %1847 = vmatprep.subr.mxu0 0.0
      %1848 = vmatpush1.msra.mxu0 0.0
      %1849 = vmatprep.subr.mxu0 0.0
      %1850 = vmatpush1.msra.mxu0 0.0
      %1851 = vmatprep.subr.mxu0 0.0
      %1852 = vmatpush1.msra.mxu0 0.0
      %1853 = vmatprep.subr.mxu0 0.0
      %1854 = vmatpush1.msra.mxu0 0.0
      %1855 = vmatprep.subr.mxu0 0.0
      %1856 = vmatpush1.msra.mxu0 0.0
      %1857 = vmatprep.subr.mxu0 0.0
      %1858 = vmatpush1.msra.mxu0 0.0
      %1859 = vmatprep.subr.mxu0 0.0
      %1860 = vmatpush1.msra.mxu0 0.0
      %1861 = vmatprep.subr.mxu0 0.0
      %1862 = vmatpush1.msra.mxu0 0.0
      %1863 = vmatprep.subr.mxu0 0.0
      %1864 = vmatpush1.msra.mxu0 0.0
      %1865 = vmatprep.subr.mxu0 0.0
      %1866 = vmatpush1.msra.mxu0 0.0
      %1867 = vmatprep.subr.mxu0 0.0
      %1868 = vmatpush1.msra.mxu0 0.0
      %1869 = vmatprep.mubr.f32.mxu0 0.0
      %1870 = vmatmul.mubr.f32.gmra.mrb[0].mxu0 %v1803
      %v1871 = vpop.f32.mrb[0].mxu0
      %v1872 = vadd.f32 %v1800, %v1871
      %v1873 = vpop.f32.mrb[0].mxu0
      %v1874 = vadd.f32 %v1800, %v1873
      %1875 = vdwg.mxu0
      %1876 = vmatprep.subr.mxu0 0.0
      %1877 = vmatpush1.msra.mxu0 %v1771
      %1878 = vmatprep.subr.mxu0 0.0
      %1879 = vmatpush1.msra.mxu0 %v1774
      %1880 = vmatprep.subr.mxu0 0.0
      %1881 = vmatpush1.msra.mxu0 %v1777
      %1882 = vmatprep.subr.mxu0 0.0
      %1883 = vmatpush1.msra.mxu0 %v1780
      %1884 = vmatprep.subr.mxu0 0.0
      %1885 = vmatpush1.msra.mxu0 %v1783
      %1886 = vmatprep.subr.mxu0 0.0
      %1887 = vmatpush1.msra.mxu0 %v1786
      %1888 = vmatprep.subr.mxu0 0.0
      %1889 = vmatpush1.msra.mxu0 %v1789
      %1890 = vmatprep.subr.mxu0 0.0
      %1891 = vmatpush1.msra.mxu0 %v1792
      %1892 = vmatprep.subr.mxu0 0.0
      %1893 = vmatpush1.msra.mxu0 %v1795
      %1894 = vmatprep.subr.mxu0 0.0
      %1895 = vmatpush1.msra.mxu0 0.0
      %1896 = vmatprep.subr.mxu0 0.0
      %1897 = vmatpush1.msra.mxu0 0.0
      %1898 = vmatprep.subr.mxu0 0.0
      %1899 = vmatpush1.msra.mxu0 0.0
      %1900 = vmatprep.subr.mxu0 0.0
      %1901 = vmatpush1.msra.mxu0 0.0
      %1902 = vmatprep.subr.mxu0 0.0
      %1903 = vmatpush1.msra.mxu0 0.0
      %1904 = vmatprep.subr.mxu0 0.0
      %1905 = vmatpush1.msra.mxu0 0.0
      %1906 = vmatprep.subr.mxu0 0.0
      %1907 = vmatpush1.msra.mxu0 0.0
      %1908 = vmatprep.subr.mxu0 0.0
      %1909 = vmatpush1.msra.mxu0 0.0
      %1910 = vmatprep.subr.mxu0 0.0
      %1911 = vmatpush1.msra.mxu0 0.0
      %1912 = vmatprep.subr.mxu0 0.0
      %1913 = vmatpush1.msra.mxu0 0.0
      %1914 = vmatprep.subr.mxu0 0.0
      %1915 = vmatpush1.msra.mxu0 0.0
      %1916 = vmatprep.subr.mxu0 0.0
      %1917 = vmatpush1.msra.mxu0 0.0
      %1918 = vmatprep.subr.mxu0 0.0
      %1919 = vmatpush1.msra.mxu0 0.0
      %1920 = vmatprep.subr.mxu0 0.0
      %1921 = vmatpush1.msra.mxu0 0.0
      %1922 = vmatprep.subr.mxu0 0.0
      %1923 = vmatpush1.msra.mxu0 0.0
      %1924 = vmatprep.subr.mxu0 0.0
      %1925 = vmatpush1.msra.mxu0 0.0
      %1926 = vmatprep.subr.mxu0 0.0
      %1927 = vmatpush1.msra.mxu0 0.0
      %1928 = vmatprep.subr.mxu0 0.0
      %1929 = vmatpush1.msra.mxu0 0.0
      %1930 = vmatprep.subr.mxu0 0.0
      %1931 = vmatpush1.msra.mxu0 0.0
      %1932 = vmatprep.subr.mxu0 0.0
      %1933 = vmatpush1.msra.mxu0 0.0
      %1934 = vmatprep.subr.mxu0 0.0
      %1935 = vmatpush1.msra.mxu0 0.0
      %1936 = vmatprep.subr.mxu0 0.0
      %1937 = vmatpush1.msra.mxu0 0.0
      %1938 = vmatprep.subr.mxu0 0.0
      %1939 = vmatpush1.msra.mxu0 0.0
      %1940 = vmatprep.mubr.f32.mxu0 0.0
      %1941 = vmatmul.mubr.f32.gmra.mrb[0].mxu0 %v1803
      %v1942 = vpop.f32.mrb[0].mxu0
      %v1943 = vadd.f32 %v1800, %v1942
      %v1944 = vpop.f32.mrb[0].mxu0
      %1945 = vdwg.mxu0
      %v1946 = vmax.f32 %v1872, 0.0
      %v1947 = vmax.f32 %v1874, 0.0
      %v1948 = vmax.f32 %v1943, 0.0
      %v1949 = vld [vmem:[%s300 + $0x4] sm:$0xff]
      %v1950 = vld [vmem:[%s300 + $0xc] sm:$0xf]
      %v1952 = vcombine.high %v1949, %v1949
      %v1954 = vadd.f32 %v1946, %v1949
      %v1955 = vadd.f32 %v1947, %v1952
      %v1956 = vadd.f32 %v1948, %v1950
      %v1959 = vcombine.low %v1954, %v1955
      %1961 = vst [vmem:[%s305] sm:$0xff] %v1959
      %1962 = vst [vmem:[%s305 + $0x8] sm:$0xf] %v1956
      %p1963 = scmp.lt.s32.totalorder %s19, 1
      %s1964 = scalar_select %p1963, %s19, 1
      %s1965 = smul.addr %s1964, 3
      %s1966 = smul.addr %s1965, 4
      %s1967 = scalar_lea.vmem %s8, %s1966
      // Predicated region
      $region53: #{merge_run_nchw.1} parent=51 // pred_check
        %p1968 = pneg %p210
      $region54: #{merge_run_nchw.1} parent=51 // pred_check_branch
        %1970 = sbr.rel (%p1968) target = $region56
      $region55: #{merge_run_nchw.1} parent=51 // pred_region
        _
      $region56: #{merge_run_nchw.1} parent=51 // pred_fallthru
        _
    $region52: #{merge_run_nchw.1} parent=5 // pred_fallthru
      _
    %p1971 = scmp.le.s32.totalorder 2, %s14
    // Predicated region
    $region57: #{merge_run_nchw.1} parent=5 // pred_check
      %p1972 = pneg %p1971
    $region58: #{merge_run_nchw.1} parent=5 // pred_check_branch
      %1974 = sbr.rel (%p1972) target = $region60
    $region59: #{merge_run_nchw.1} parent=5 // pred_region
      %s1975 = ssub.s32 %s14, 2
      // Predicated region
      $region61: #{merge_run_nchw.1} parent=59 // pred_check
        %p1976 = pneg %p216
      $region62: #{merge_run_nchw.1} parent=59 // pred_check_branch
        %1978 = sbr.rel (%p1976) target = $region64
      $region63: #{merge_run_nchw.1} parent=59 // pred_region
        %p1979 = scmp.lt.s32.totalorder %s20, 1
        %s1980 = scalar_select %p1979, %s20, 1
        %s1981 = smul.addr %s1980, 3
        %s1982 = smul.addr %s1981, 4
        %s1983 = scalar_lea.vmem %s8, %s1982
      $region64: #{merge_run_nchw.1} parent=59 // pred_fallthru
        _
    $region60: #{merge_run_nchw.1} parent=5 // pred_fallthru
      _
  $region6: #{merge_run_nchw.1} parent=0 // loop_footer
    %s18 = sadd.s32 1, %s14
  $region7: #{merge_run_nchw.1} parent=0 // loop_footer_branch
    %13 = sbr.rel target = $region3
  $region8: #{merge_run_nchw.1} parent=0 // loop_exit
    _

</llo_original>
